<compile_context>
chip_gen: v5e
topology: v5e:2x2
jax: 0.10.0
libtpu: 0.0.40
codegen_flags: <defaults>
</compile_context>

<pallas_src>
import functools
import math

import jax
import jax.numpy as jnp
from jax.experimental import pallas as pl
from jax.experimental.pallas import tpu as pltpu


def _round_up(x, m):
    return (x + m - 1) // m * m


def _sigmoid(x):
    # One EUP (tanh) pass instead of exp + reciprocal.
    return 0.5 * jnp.tanh(0.5 * x) + 0.5


def _lstm_recurrence_kernel(gates_ref, wh_ref, h_out_ref, c_out_ref, h_sc, c_sc,
                            *, t_blk, h_pad, seq_len, unroll):
    """One grid step processes t_blk timesteps for one batch block.

    gates_ref: (t_blk, B_blk, 4*h_pad)  precomputed x@W_x + b  (bf16 on TPU)
    wh_ref:    (h_pad, 4*h_pad)         resident recurrent weights (single-buffered)
    h_out/c_out: (B_blk, h_pad)         final states (written on last time block)
    h_sc/c_sc: (B_blk, h_pad) f32 scratch carries that persist across grid steps
    """
    tb = pl.program_id(1)  # time-block index (axis 0 is the parallel batch-block axis)

    @pl.when(tb == 0)
    def _init():
        h_sc[...] = jnp.zeros_like(h_sc)
        c_sc[...] = jnp.zeros_like(c_sc)

    wh = wh_ref[...]  # resident across the whole sequence

    def make_step(masked):
        def step(j, carry):
            h_prev, c_prev = carry                                # (B_blk, h_pad) f32
            # Precomputed input projection for this timestep. The add against the f32
            # recurrent matmul promotes the (possibly bf16) slab back to f32.
            g = gates_ref[j]                                      # (B_blk, 4*h_pad)
            g = g + jnp.dot(h_prev.astype(wh.dtype), wh,
                            preferred_element_type=jnp.float32)
            # Lane-aligned gate slices (h_pad is a multiple of 128) -> free views.
            i_t = _sigmoid(g[:, 0 * h_pad:1 * h_pad])
            f_t = _sigmoid(g[:, 1 * h_pad:2 * h_pad])
            g_t = jnp.tanh(g[:, 2 * h_pad:3 * h_pad])
            o_t = _sigmoid(g[:, 3 * h_pad:4 * h_pad])
            c_t = f_t * c_prev + i_t * g_t
            h_t = o_t * jnp.tanh(c_t)
            if masked:
                # Padded timesteps at the tail of the last block: keep previous state.
                valid = (tb * t_blk + j) < seq_len
                h_t = jnp.where(valid, h_t, h_prev)
                c_t = jnp.where(valid, c_t, c_prev)
            return h_t, c_t
        return step

    def run(masked):
        h, c = jax.lax.fori_loop(0, t_blk, make_step(masked),
                                 (h_sc[...], c_sc[...]), unroll=unroll)
        h_sc[...] = h
        c_sc[...] = c

    if seq_len % t_blk == 0:
        # No tail: never pay for the masking selects.
        run(False)
    else:
        last = pl.num_programs(1) - 1

        @pl.when(tb != last)
        def _full_blocks():
            run(False)

        @pl.when(tb == last)
        def _tail_block():
            run(True)

    @pl.when(tb == pl.num_programs(1) - 1)
    def _finalize():
        h_out_ref[...] = h_sc[...].astype(h_out_ref.dtype)
        c_out_ref[...] = c_sc[...].astype(c_out_ref.dtype)


_VMEM_BUDGET = 48 << 20  # conservative: fits v7x's 64 MiB physical VMEM


def _on_tpu():
    try:
        return jax.default_backend() == "tpu"
    except Exception:
        return False


def _num_tensorcores_per_chip():
    # v7x exposes 2 TensorCores per chip; earlier generations here have 1.
    try:
        kind = jax.devices()[0].device_kind.lower()
    except Exception:
        return 1
    return 2 if "v7" in kind else 1


def lstm_forward(x, w_x, w_h, b, *, t_blk=None, num_batch_blocks=None, unroll=None):
    """x: (batch, seq, feature).  Gate-stacked weights in [i, f, g, o] order:
    w_x (F, 4H), w_h (H, 4H), b (1, 4H) with b = b_i* + b_h* (what the PyTorch fwd adds).
    Returns (h_T, c_T), each (batch, hidden)."""
    B, S, F = x.shape
    H = w_h.shape[0]
    assert w_x.shape == (F, 4 * H)
    assert w_h.shape == (H, 4 * H)
    b = b.reshape(1, 4 * H)

    on_tpu = _on_tpu()
    # Matmul-operand / gate-slab dtype: bf16 on TPU (MXU-native, halves the dominant
    # HBM stream and the gate VMEM blocks); f32 elsewhere (XLA:CPU cannot execute a
    # bf16 x bf16 -> f32 dot, which broke the previous version under interpretation).
    mm_dtype = jnp.bfloat16 if on_tpu else jnp.float32
    gate_dtype = mm_dtype
    gate_bytes = 2 if gate_dtype == jnp.bfloat16 else 4
    mm_bytes = 2 if mm_dtype == jnp.bfloat16 else 4

    H_pad = _round_up(H, 128)          # lane-aligned gate slices
    G_pad = 4 * H_pad

    # ---- batch blocking: split >=2 ways only on multi-TensorCore chips (v7x). On
    #      single-TC chips (v5e/v6e) extra blocks only add per-grid-step overhead and
    #      shrink the matmul M, so keep one block there. ----
    if num_batch_blocks is None:
        if on_tpu and _num_tensorcores_per_chip() >= 2 and B >= 16:
            num_batch_blocks = 2
        else:
            num_batch_blocks = 1
    n_b = num_batch_blocks
    B_pad = _round_up(B, 8 * n_b)      # sublane-aligned batch, divisible by n_b
    b_blk = B_pad // n_b

    # ---- budget-driven t_blk + explicit scoped-VMEM limit ----
    fixed_vmem = (H_pad * G_pad * mm_bytes        # resident W_h (single-buffered)
                  + 2 * b_blk * H_pad * 4         # f32 h/c scratch carries
                  + 2 * 2 * b_blk * H_pad * 4)    # double-buffered outputs (upper bound)
    per_t = 2 * b_blk * G_pad * gate_bytes        # double-buffered gate rows / timestep
    if t_blk is None:
        t_blk = int(max(1, min((_VMEM_BUDGET - fixed_vmem) // per_t, 64, S)))
    n_t = pl.cdiv(S, t_blk)
    S_pad = n_t * t_blk
    vmem_limit = int(min(max(fixed_vmem + t_blk * per_t + (4 << 20), 32 << 20), 56 << 20))

    if unroll is None:
        # Full unroll only while the per-step live set stays vreg-friendly; otherwise a
        # partial unroll keeps LLO visibility without a spill blow-up.
        unroll = True if b_blk * H_pad <= 128 * 512 else 8

    # Pad each gate's H columns to H_pad with zeros. The padded lanes of h/c then stay
    # exactly 0 through the recurrence (sigmoid(0)=0.5 forget gate on a 0 cell, tanh(0)=0
    # candidate), so padding does not change the real outputs.
    def pad_gate_cols(w):
        parts = []
        for k in range(4):
            p = w[..., k * H:(k + 1) * H]
            parts.append(jnp.pad(p, [(0, 0)] * (w.ndim - 1) + [(0, H_pad - H)]))
        return jnp.concatenate(parts, axis=-1)

    w_x_p = pad_gate_cols(w_x)                                       # (F, G_pad)
    b_p = pad_gate_cols(b)                                           # (1, G_pad)
    w_h_p = jnp.pad(pad_gate_cols(w_h), ((0, H_pad - H), (0, 0)))    # (H_pad, G_pad)
    w_h_mm = w_h_p.astype(mm_dtype)

    x_p = jnp.pad(x, ((0, B_pad - B), (0, 0), (0, 0)))               # (B_pad, S, F)

    # --- Phase 1: hoist the input projection out of the recurrence. One large GEMM
    #     (f32 accumulation) over all timesteps, written directly in (seq, batch,
    #     4H_pad) order, stored in gate_dtype (bf16 on TPU).
    gates = (jnp.einsum(
        'bsf,fg->sbg',
        x_p.astype(mm_dtype), w_x_p.astype(mm_dtype),
        preferred_element_type=jnp.float32,
    ) + b_p).astype(gate_dtype)                                      # (S, B_pad, G_pad)
    if S_pad != S:
        gates = jnp.pad(gates, ((0, S_pad - S), (0, 0), (0, 0)))

    kernel = functools.partial(
        _lstm_recurrence_kernel, t_blk=t_blk, h_pad=H_pad, seq_len=S, unroll=unroll)

    # W_h's index map is constant, so a second pipeline buffer is pure waste
    # (e.g. 16 MiB at H=1024); request single-buffering on TPU.
    wh_spec = pl.BlockSpec((H_pad, G_pad), lambda bb, tt: (0, 0))
    if on_tpu:
        try:
            wh_spec = pl.BlockSpec((H_pad, G_pad), lambda bb, tt: (0, 0),
                                   pipeline_mode=pl.Buffered(1))
        except TypeError:
            pass  # older jax without pipeline_mode: fall back to default buffering

    grid_spec = pltpu.PrefetchScalarGridSpec(
        num_scalar_prefetch=0,
        grid=(n_b, n_t),
        in_specs=[
            # One block = t_blk timesteps of the precomputed gate slab for this batch block.
            pl.BlockSpec((t_blk, b_blk, G_pad), lambda bb, tt: (tt, bb, 0)),
            # Recurrent weights stay resident across the whole sequence.
            wh_spec,
        ],
        out_specs=[
            pl.BlockSpec((b_blk, H_pad), lambda bb, tt: (bb, 0)),    # h_T
            pl.BlockSpec((b_blk, H_pad), lambda bb, tt: (bb, 0)),    # c_T
        ],
        scratch_shapes=[
            pltpu.VMEM((b_blk, H_pad), jnp.float32),                 # h carry (f32)
            pltpu.VMEM((b_blk, H_pad), jnp.float32),                 # c carry (f32)
        ],
    )

    h_p, c_p = pl.pallas_call(
        kernel,
        out_shape=(
            jax.ShapeDtypeStruct((B_pad, H_pad), x.dtype),
            jax.ShapeDtypeStruct((B_pad, H_pad), x.dtype),
        ),
        grid_spec=grid_spec,
        compiler_params=pltpu.CompilerParams(
            # Batch blocks are independent recurrences -> "parallel" (megacore sharding
            # on v7x); the time axis is the sequential recurrence -> "arbitrary".
            dimension_semantics=("parallel", "arbitrary"),
            vmem_limit_bytes=vmem_limit,
        ),
    )(gates, w_h_mm)

    return h_p[:B, :H], c_p[:B, :H]


def _xavier_uniform(key, shape, dtype=jnp.float32):
    fan_in, fan_out = shape
    bound = math.sqrt(6.0 / (fan_in + fan_out))
    return jax.random.uniform(key, shape, dtype=dtype, minval=-bound, maxval=bound)


def make_params(key, input_size, hidden_size):
    """Deterministic init mirroring the module: xavier_uniform matrices, zero biases."""
    keys = jax.random.split(key, 8)
    # gate order [i, f, g, o]
    W_ii = _xavier_uniform(keys[0], (input_size, hidden_size))
    W_hi = _xavier_uniform(keys[1], (hidden_size, hidden_size))
    W_if = _xavier_uniform(keys[2], (input_size, hidden_size))
    W_hf = _xavier_uniform(keys[3], (hidden_size, hidden_size))
    W_ig = _xavier_uniform(keys[4], (input_size, hidden_size))
    W_hg = _xavier_uniform(keys[5], (hidden_size, hidden_size))
    W_io = _xavier_uniform(keys[6], (input_size, hidden_size))
    W_ho = _xavier_uniform(keys[7], (hidden_size, hidden_size))
    zeros_h = jnp.zeros((hidden_size,), jnp.float32)
    b_ii = b_hi = b_if = b_hf = b_ig = b_hg = b_io = b_ho = zeros_h

    w_x = jnp.concatenate([W_ii, W_if, W_ig, W_io], axis=1)            # (F, 4H)
    w_h = jnp.concatenate([W_hi, W_hf, W_hg, W_ho], axis=1)            # (H, 4H)
    bias = jnp.concatenate(
        [b_ii + b_hi, b_if + b_hf, b_ig + b_hg, b_io + b_ho], axis=0
    ).reshape(1, -1)                                                   # (1, 4H)
    return w_x, w_h, bias


def lstm_reference(x, w_x, w_h, b):
    """Pure-JAX f32 reference matching the PyTorch forward semantics."""
    B, S, F = x.shape
    H = w_h.shape[0]
    h = jnp.zeros((B, H), jnp.float32)
    c = jnp.zeros((B, H), jnp.float32)
    for t in range(S):
        gates = x[:, t, :] @ w_x + h @ w_h + b
        i_t = jax.nn.sigmoid(gates[:, 0 * H:1 * H])
        f_t = jax.nn.sigmoid(gates[:, 1 * H:2 * H])
        g_t = jnp.tanh(gates[:, 2 * H:3 * H])
        o_t = jax.nn.sigmoid(gates[:, 3 * H:4 * H])
        c = f_t * c + i_t * g_t
        h = o_t * jnp.tanh(c)
    return h, c


if __name__ == "__main__":
    batch, seq, input_size, hidden_size = 8, 8, 16, 32

    key = jax.random.PRNGKey(0)
    k_x, k_p = jax.random.split(key)
    x = jax.random.normal(k_x, (batch, seq, input_size), dtype=jnp.float32)
    w_x, w_h, b = make_params(k_p, input_size, hidden_size)

    h_t, c_t = lstm_forward(x, w_x, w_h, b)
    h_t = jax.block_until_ready(h_t)
    c_t = jax.block_until_ready(c_t)

    h_ref, c_ref = lstm_reference(x, w_x, w_h, b)
    assert h_t.shape == (batch, hidden_size) and c_t.shape == (batch, hidden_size)
    # bf16 matmul operands (f32 accumulation) on TPU vs f32 reference -> loose tolerance.
    assert jnp.allclose(h_t, h_ref, atol=3e-2, rtol=3e-2)
    assert jnp.allclose(c_t, c_ref, atol=3e-2, rtol=3e-2)

    print("KERNEL_OK")
</pallas_src>

<mosaic_0001>
module attributes {stable_mosaic.version = 11 : i64} {
  func.func @_lstm_recurrence_kernel(%arg0: i32, %arg1: i32, %arg2: memref<8x8x512xf32, #tpu.memory_space<vmem>>, %arg3: memref<128x512xf32, #tpu.memory_space<vmem>>, %arg4: memref<8x128xf32, #tpu.memory_space<vmem>>, %arg5: memref<8x128xf32, #tpu.memory_space<vmem>>, %arg6: memref<8x128xf32, #tpu.memory_space<vmem>>, %arg7: memref<8x128xf32, #tpu.memory_space<vmem>>) attributes {dimension_semantics = [#tpu.dimension_semantics<parallel>, #tpu.dimension_semantics<arbitrary>], iteration_bounds = array<i64: 1, 1>, scalar_prefetch = 0 : i64, scratch_operands = 2 : i64, tpu.core_type = #tpu.core_type<tc>, window_params = [{transform_indices = @transform_0, window_bounds = array<i64: 8, 8, 512>}, {pipeline_mode = #tpu.pipeline_mode<synchronous>, transform_indices = @transform_1, window_bounds = array<i64: 128, 512>}, {transform_indices = @transform_2, window_bounds = array<i64: 8, 128>}, {transform_indices = @transform_3, window_bounds = array<i64: 8, 128>}]} {
    %c0_i32 = arith.constant 0 : i32
    %0 = arith.cmpi eq, %arg1, %c0_i32 : i32
    %1 = arith.extui %0 : i1 to i32
    %c0_i32_0 = arith.constant 0 : i32
    %2 = arith.cmpi ne, %1, %c0_i32_0 : i32
    scf.if %2 {
      %cst_108 = arith.constant 0.000000e+00 : f32
      %299 = vector.broadcast %cst_108 : f32 to vector<8x128xf32>
      %c0_109 = arith.constant 0 : index
      %c0_110 = arith.constant 0 : index
      %300 = vector.load %arg6[%c0_109, %c0_110] : memref<8x128xf32, #tpu.memory_space<vmem>>, vector<8x128xf32>
      tpu.vector_store %arg6[%c0_109, %c0_110], %299 {strides = array<i32>} : memref<8x128xf32, #tpu.memory_space<vmem>>, vector<8x128xf32>,
      %cst_111 = arith.constant 0.000000e+00 : f32
      %301 = vector.broadcast %cst_111 : f32 to vector<8x128xf32>
      %c0_112 = arith.constant 0 : index
      %c0_113 = arith.constant 0 : index
      %302 = vector.load %arg7[%c0_112, %c0_113] : memref<8x128xf32, #tpu.memory_space<vmem>>, vector<8x128xf32>
      tpu.vector_store %arg7[%c0_112, %c0_113], %301 {strides = array<i32>} : memref<8x128xf32, #tpu.memory_space<vmem>>, vector<8x128xf32>,
    } else {
    }
    %c0 = arith.constant 0 : index
    %c0_1 = arith.constant 0 : index
    %3 = vector.load %arg3[%c0, %c0_1] : memref<128x512xf32, #tpu.memory_space<vmem>>, vector<128x512xf32>
    %c0_2 = arith.constant 0 : index
    %c0_3 = arith.constant 0 : index
    %4 = vector.load %arg6[%c0_2, %c0_3] : memref<8x128xf32, #tpu.memory_space<vmem>>, vector<8x128xf32>
    %c0_4 = arith.constant 0 : index
    %c0_5 = arith.constant 0 : index
    %5 = vector.load %arg7[%c0_4, %c0_5] : memref<8x128xf32, #tpu.memory_space<vmem>>, vector<8x128xf32>
    %c0_i32_6 = arith.constant 0 : i32
    %6 = arith.index_cast %c0_i32_6 : i32 to index
    %c0_7 = arith.constant 0 : index
    %c0_8 = arith.constant 0 : index
    %7 = vector.load %arg2[%6, %c0_7, %c0_8] : memref<8x8x512xf32, #tpu.memory_space<vmem>>, vector<1x8x512xf32>
    %8 = vector.shape_cast %7 : vector<1x8x512xf32> to vector<8x512xf32>
    %cst = arith.constant dense<0.000000e+00> : vector<8x512xf32>
    %9 = tpu.matmul %4, %3, %cst {dimension_numbers = #tpu.dot_dimension_numbers<[1], [0], [0], [1], [0, 0, 1, 1], [], []>} : vector<8x128xf32>, vector<128x512xf32>, vector<8x512xf32> -> vector<8x512xf32>
    %10 = arith.addf %8, %9 : vector<8x512xf32>
    %11 = vector.extract_strided_slice %10 {offsets = [0, 0], sizes = [8, 128], strides = [1, 1]} : vector<8x512xf32> to vector<8x128xf32>
    %cst_9 = arith.constant 5.000000e-01 : f32
    %12 = vector.broadcast %cst_9 : f32 to vector<8x128xf32>
    %13 = arith.mulf %12, %11 : vector<8x128xf32>
    %14 = math.tanh %13 : vector<8x128xf32>
    %cst_10 = arith.constant 5.000000e-01 : f32
    %15 = vector.broadcast %cst_10 : f32 to vector<8x128xf32>
    %16 = arith.mulf %15, %14 : vector<8x128xf32>
    %cst_11 = arith.constant 5.000000e-01 : f32
    %17 = vector.broadcast %cst_11 : f32 to vector<8x128xf32>
    %18 = arith.addf %16, %17 : vector<8x128xf32>
    %19 = vector.extract_strided_slice %10 {offsets = [0, 128], sizes = [8, 128], strides = [1, 1]} : vector<8x512xf32> to vector<8x128xf32>
    %cst_12 = arith.constant 5.000000e-01 : f32
    %20 = vector.broadcast %cst_12 : f32 to vector<8x128xf32>
    %21 = arith.mulf %20, %19 : vector<8x128xf32>
    %22 = math.tanh %21 : vector<8x128xf32>
    %cst_13 = arith.constant 5.000000e-01 : f32
    %23 = vector.broadcast %cst_13 : f32 to vector<8x128xf32>
    %24 = arith.mulf %23, %22 : vector<8x128xf32>
    %cst_14 = arith.constant 5.000000e-01 : f32
    %25 = vector.broadcast %cst_14 : f32 to vector<8x128xf32>
    %26 = arith.addf %24, %25 : vector<8x128xf32>
    %27 = vector.extract_strided_slice %10 {offsets = [0, 256], sizes = [8, 128], strides = [1, 1]} : vector<8x512xf32> to vector<8x128xf32>
    %28 = math.tanh %27 : vector<8x128xf32>
    %29 = vector.extract_strided_slice %10 {offsets = [0, 384], sizes = [8, 128], strides = [1, 1]} : vector<8x512xf32> to vector<8x128xf32>
    %cst_15 = arith.constant 5.000000e-01 : f32
    %30 = vector.broadcast %cst_15 : f32 to vector<8x128xf32>
    %31 = arith.mulf %30, %29 : vector<8x128xf32>
    %32 = math.tanh %31 : vector<8x128xf32>
    %cst_16 = arith.constant 5.000000e-01 : f32
    %33 = vector.broadcast %cst_16 : f32 to vector<8x128xf32>
    %34 = arith.mulf %33, %32 : vector<8x128xf32>
    %cst_17 = arith.constant 5.000000e-01 : f32
    %35 = vector.broadcast %cst_17 : f32 to vector<8x128xf32>
    %36 = arith.addf %34, %35 : vector<8x128xf32>
    %37 = arith.mulf %26, %5 : vector<8x128xf32>
    %38 = arith.mulf %18, %28 : vector<8x128xf32>
    %39 = arith.addf %37, %38 : vector<8x128xf32>
    %40 = math.tanh %39 : vector<8x128xf32>
    %41 = arith.mulf %36, %40 : vector<8x128xf32>
    %c1_i32 = arith.constant 1 : i32
    %42 = arith.index_cast %c1_i32 : i32 to index
    %c0_18 = arith.constant 0 : index
    %c0_19 = arith.constant 0 : index
    %43 = vector.load %arg2[%42, %c0_18, %c0_19] : memref<8x8x512xf32, #tpu.memory_space<vmem>>, vector<1x8x512xf32>
    %44 = vector.shape_cast %43 : vector<1x8x512xf32> to vector<8x512xf32>
    %cst_20 = arith.constant dense<0.000000e+00> : vector<8x512xf32>
    %45 = tpu.matmul %41, %3, %cst_20 {dimension_numbers = #tpu.dot_dimension_numbers<[1], [0], [0], [1], [0, 0, 1, 1], [], []>} : vector<8x128xf32>, vector<128x512xf32>, vector<8x512xf32> -> vector<8x512xf32>
    %46 = arith.addf %44, %45 : vector<8x512xf32>
    %47 = vector.extract_strided_slice %46 {offsets = [0, 0], sizes = [8, 128], strides = [1, 1]} : vector<8x512xf32> to vector<8x128xf32>
    %cst_21 = arith.constant 5.000000e-01 : f32
    %48 = vector.broadcast %cst_21 : f32 to vector<8x128xf32>
    %49 = arith.mulf %48, %47 : vector<8x128xf32>
    %50 = math.tanh %49 : vector<8x128xf32>
    %cst_22 = arith.constant 5.000000e-01 : f32
    %51 = vector.broadcast %cst_22 : f32 to vector<8x128xf32>
    %52 = arith.mulf %51, %50 : vector<8x128xf32>
    %cst_23 = arith.constant 5.000000e-01 : f32
    %53 = vector.broadcast %cst_23 : f32 to vector<8x128xf32>
    %54 = arith.addf %52, %53 : vector<8x128xf32>
    %55 = vector.extract_strided_slice %46 {offsets = [0, 128], sizes = [8, 128], strides = [1, 1]} : vector<8x512xf32> to vector<8x128xf32>
    %cst_24 = arith.constant 5.000000e-01 : f32
    %56 = vector.broadcast %cst_24 : f32 to vector<8x128xf32>
    %57 = arith.mulf %56, %55 : vector<8x128xf32>
    %58 = math.tanh %57 : vector<8x128xf32>
    %cst_25 = arith.constant 5.000000e-01 : f32
    %59 = vector.broadcast %cst_25 : f32 to vector<8x128xf32>
    %60 = arith.mulf %59, %58 : vector<8x128xf32>
    %cst_26 = arith.constant 5.000000e-01 : f32
    %61 = vector.broadcast %cst_26 : f32 to vector<8x128xf32>
    %62 = arith.addf %60, %61 : vector<8x128xf32>
    %63 = vector.extract_strided_slice %46 {offsets = [0, 256], sizes = [8, 128], strides = [1, 1]} : vector<8x512xf32> to vector<8x128xf32>
    %64 = math.tanh %63 : vector<8x128xf32>
    %65 = vector.extract_strided_slice %46 {offsets = [0, 384], sizes = [8, 128], strides = [1, 1]} : vector<8x512xf32> to vector<8x128xf32>
    %cst_27 = arith.constant 5.000000e-01 : f32
    %66 = vector.broadcast %cst_27 : f32 to vector<8x128xf32>
    %67 = arith.mulf %66, %65 : vector<8x128xf32>
    %68 = math.tanh %67 : vector<8x128xf32>
    %cst_28 = arith.constant 5.000000e-01 : f32
    %69 = vector.broadcast %cst_28 : f32 to vector<8x128xf32>
    %70 = arith.mulf %69, %68 : vector<8x128xf32>
    %cst_29 = arith.constant 5.000000e-01 : f32
    %71 = vector.broadcast %cst_29 : f32 to vector<8x128xf32>
    %72 = arith.addf %70, %71 : vector<8x128xf32>
    %73 = arith.mulf %62, %39 : vector<8x128xf32>
    %74 = arith.mulf %54, %64 : vector<8x128xf32>
    %75 = arith.addf %73, %74 : vector<8x128xf32>
    %76 = math.tanh %75 : vector<8x128xf32>
    %77 = arith.mulf %72, %76 : vector<8x128xf32>
    %c2_i32 = arith.constant 2 : i32
    %78 = arith.index_cast %c2_i32 : i32 to index
    %c0_30 = arith.constant 0 : index
    %c0_31 = arith.constant 0 : index
    %79 = vector.load %arg2[%78, %c0_30, %c0_31] : memref<8x8x512xf32, #tpu.memory_space<vmem>>, vector<1x8x512xf32>
    %80 = vector.shape_cast %79 : vector<1x8x512xf32> to vector<8x512xf32>
    %cst_32 = arith.constant dense<0.000000e+00> : vector<8x512xf32>
    %81 = tpu.matmul %77, %3, %cst_32 {dimension_numbers = #tpu.dot_dimension_numbers<[1], [0], [0], [1], [0, 0, 1, 1], [], []>} : vector<8x128xf32>, vector<128x512xf32>, vector<8x512xf32> -> vector<8x512xf32>
    %82 = arith.addf %80, %81 : vector<8x512xf32>
    %83 = vector.extract_strided_slice %82 {offsets = [0, 0], sizes = [8, 128], strides = [1, 1]} : vector<8x512xf32> to vector<8x128xf32>
    %cst_33 = arith.constant 5.000000e-01 : f32
    %84 = vector.broadcast %cst_33 : f32 to vector<8x128xf32>
    %85 = arith.mulf %84, %83 : vector<8x128xf32>
    %86 = math.tanh %85 : vector<8x128xf32>
    %cst_34 = arith.constant 5.000000e-01 : f32
    %87 = vector.broadcast %cst_34 : f32 to vector<8x128xf32>
    %88 = arith.mulf %87, %86 : vector<8x128xf32>
    %cst_35 = arith.constant 5.000000e-01 : f32
    %89 = vector.broadcast %cst_35 : f32 to vector<8x128xf32>
    %90 = arith.addf %88, %89 : vector<8x128xf32>
    %91 = vector.extract_strided_slice %82 {offsets = [0, 128], sizes = [8, 128], strides = [1, 1]} : vector<8x512xf32> to vector<8x128xf32>
    %cst_36 = arith.constant 5.000000e-01 : f32
    %92 = vector.broadcast %cst_36 : f32 to vector<8x128xf32>
    %93 = arith.mulf %92, %91 : vector<8x128xf32>
    %94 = math.tanh %93 : vector<8x128xf32>
    %cst_37 = arith.constant 5.000000e-01 : f32
    %95 = vector.broadcast %cst_37 : f32 to vector<8x128xf32>
    %96 = arith.mulf %95, %94 : vector<8x128xf32>
    %cst_38 = arith.constant 5.000000e-01 : f32
    %97 = vector.broadcast %cst_38 : f32 to vector<8x128xf32>
    %98 = arith.addf %96, %97 : vector<8x128xf32>
    %99 = vector.extract_strided_slice %82 {offsets = [0, 256], sizes = [8, 128], strides = [1, 1]} : vector<8x512xf32> to vector<8x128xf32>
    %100 = math.tanh %99 : vector<8x128xf32>
    %101 = vector.extract_strided_slice %82 {offsets = [0, 384], sizes = [8, 128], strides = [1, 1]} : vector<8x512xf32> to vector<8x128xf32>
    %cst_39 = arith.constant 5.000000e-01 : f32
    %102 = vector.broadcast %cst_39 : f32 to vector<8x128xf32>
    %103 = arith.mulf %102, %101 : vector<8x128xf32>
    %104 = math.tanh %103 : vector<8x128xf32>
    %cst_40 = arith.constant 5.000000e-01 : f32
    %105 = vector.broadcast %cst_40 : f32 to vector<8x128xf32>
    %106 = arith.mulf %105, %104 : vector<8x128xf32>
    %cst_41 = arith.constant 5.000000e-01 : f32
    %107 = vector.broadcast %cst_41 : f32 to vector<8x128xf32>
    %108 = arith.addf %106, %107 : vector<8x128xf32>
    %109 = arith.mulf %98, %75 : vector<8x128xf32>
    %110 = arith.mulf %90, %100 : vector<8x128xf32>
    %111 = arith.addf %109, %110 : vector<8x128xf32>
    %112 = math.tanh %111 : vector<8x128xf32>
    %113 = arith.mulf %108, %112 : vector<8x128xf32>
    %c3_i32 = arith.constant 3 : i32
    %114 = arith.index_cast %c3_i32 : i32 to index
    %c0_42 = arith.constant 0 : index
    %c0_43 = arith.constant 0 : index
    %115 = vector.load %arg2[%114, %c0_42, %c0_43] : memref<8x8x512xf32, #tpu.memory_space<vmem>>, vector<1x8x512xf32>
    %116 = vector.shape_cast %115 : vector<1x8x512xf32> to vector<8x512xf32>
    %cst_44 = arith.constant dense<0.000000e+00> : vector<8x512xf32>
    %117 = tpu.matmul %113, %3, %cst_44 {dimension_numbers = #tpu.dot_dimension_numbers<[1], [0], [0], [1], [0, 0, 1, 1], [], []>} : vector<8x128xf32>, vector<128x512xf32>, vector<8x512xf32> -> vector<8x512xf32>
    %118 = arith.addf %116, %117 : vector<8x512xf32>
    %119 = vector.extract_strided_slice %118 {offsets = [0, 0], sizes = [8, 128], strides = [1, 1]} : vector<8x512xf32> to vector<8x128xf32>
    %cst_45 = arith.constant 5.000000e-01 : f32
    %120 = vector.broadcast %cst_45 : f32 to vector<8x128xf32>
    %121 = arith.mulf %120, %119 : vector<8x128xf32>
    %122 = math.tanh %121 : vector<8x128xf32>
    %cst_46 = arith.constant 5.000000e-01 : f32
    %123 = vector.broadcast %cst_46 : f32 to vector<8x128xf32>
    %124 = arith.mulf %123, %122 : vector<8x128xf32>
    %cst_47 = arith.constant 5.000000e-01 : f32
    %125 = vector.broadcast %cst_47 : f32 to vector<8x128xf32>
    %126 = arith.addf %124, %125 : vector<8x128xf32>
    %127 = vector.extract_strided_slice %118 {offsets = [0, 128], sizes = [8, 128], strides = [1, 1]} : vector<8x512xf32> to vector<8x128xf32>
    %cst_48 = arith.constant 5.000000e-01 : f32
    %128 = vector.broadcast %cst_48 : f32 to vector<8x128xf32>
    %129 = arith.mulf %128, %127 : vector<8x128xf32>
    %130 = math.tanh %129 : vector<8x128xf32>
    %cst_49 = arith.constant 5.000000e-01 : f32
    %131 = vector.broadcast %cst_49 : f32 to vector<8x128xf32>
    %132 = arith.mulf %131, %130 : vector<8x128xf32>
    %cst_50 = arith.constant 5.000000e-01 : f32
    %133 = vector.broadcast %cst_50 : f32 to vector<8x128xf32>
    %134 = arith.addf %132, %133 : vector<8x128xf32>
    %135 = vector.extract_strided_slice %118 {offsets = [0, 256], sizes = [8, 128], strides = [1, 1]} : vector<8x512xf32> to vector<8x128xf32>
    %136 = math.tanh %135 : vector<8x128xf32>
    %137 = vector.extract_strided_slice %118 {offsets = [0, 384], sizes = [8, 128], strides = [1, 1]} : vector<8x512xf32> to vector<8x128xf32>
    %cst_51 = arith.constant 5.000000e-01 : f32
    %138 = vector.broadcast %cst_51 : f32 to vector<8x128xf32>
    %139 = arith.mulf %138, %137 : vector<8x128xf32>
    %140 = math.tanh %139 : vector<8x128xf32>
    %cst_52 = arith.constant 5.000000e-01 : f32
    %141 = vector.broadcast %cst_52 : f32 to vector<8x128xf32>
    %142 = arith.mulf %141, %140 : vector<8x128xf32>
    %cst_53 = arith.constant 5.000000e-01 : f32
    %143 = vector.broadcast %cst_53 : f32 to vector<8x128xf32>
    %144 = arith.addf %142, %143 : vector<8x128xf32>
    %145 = arith.mulf %134, %111 : vector<8x128xf32>
    %146 = arith.mulf %126, %136 : vector<8x128xf32>
    %147 = arith.addf %145, %146 : vector<8x128xf32>
    %148 = math.tanh %147 : vector<8x128xf32>
    %149 = arith.mulf %144, %148 : vector<8x128xf32>
    %c4_i32 = arith.constant 4 : i32
    %150 = arith.index_cast %c4_i32 : i32 to index
    %c0_54 = arith.constant 0 : index
    %c0_55 = arith.constant 0 : index
    %151 = vector.load %arg2[%150, %c0_54, %c0_55] : memref<8x8x512xf32, #tpu.memory_space<vmem>>, vector<1x8x512xf32>
    %152 = vector.shape_cast %151 : vector<1x8x512xf32> to vector<8x512xf32>
    %cst_56 = arith.constant dense<0.000000e+00> : vector<8x512xf32>
    %153 = tpu.matmul %149, %3, %cst_56 {dimension_numbers = #tpu.dot_dimension_numbers<[1], [0], [0], [1], [0, 0, 1, 1], [], []>} : vector<8x128xf32>, vector<128x512xf32>, vector<8x512xf32> -> vector<8x512xf32>
    %154 = arith.addf %152, %153 : vector<8x512xf32>
    %155 = vector.extract_strided_slice %154 {offsets = [0, 0], sizes = [8, 128], strides = [1, 1]} : vector<8x512xf32> to vector<8x128xf32>
    %cst_57 = arith.constant 5.000000e-01 : f32
    %156 = vector.broadcast %cst_57 : f32 to vector<8x128xf32>
    %157 = arith.mulf %156, %155 : vector<8x128xf32>
    %158 = math.tanh %157 : vector<8x128xf32>
    %cst_58 = arith.constant 5.000000e-01 : f32
    %159 = vector.broadcast %cst_58 : f32 to vector<8x128xf32>
    %160 = arith.mulf %159, %158 : vector<8x128xf32>
    %cst_59 = arith.constant 5.000000e-01 : f32
    %161 = vector.broadcast %cst_59 : f32 to vector<8x128xf32>
    %162 = arith.addf %160, %161 : vector<8x128xf32>
    %163 = vector.extract_strided_slice %154 {offsets = [0, 128], sizes = [8, 128], strides = [1, 1]} : vector<8x512xf32> to vector<8x128xf32>
    %cst_60 = arith.constant 5.000000e-01 : f32
    %164 = vector.broadcast %cst_60 : f32 to vector<8x128xf32>
    %165 = arith.mulf %164, %163 : vector<8x128xf32>
    %166 = math.tanh %165 : vector<8x128xf32>
    %cst_61 = arith.constant 5.000000e-01 : f32
    %167 = vector.broadcast %cst_61 : f32 to vector<8x128xf32>
    %168 = arith.mulf %167, %166 : vector<8x128xf32>
    %cst_62 = arith.constant 5.000000e-01 : f32
    %169 = vector.broadcast %cst_62 : f32 to vector<8x128xf32>
    %170 = arith.addf %168, %169 : vector<8x128xf32>
    %171 = vector.extract_strided_slice %154 {offsets = [0, 256], sizes = [8, 128], strides = [1, 1]} : vector<8x512xf32> to vector<8x128xf32>
    %172 = math.tanh %171 : vector<8x128xf32>
    %173 = vector.extract_strided_slice %154 {offsets = [0, 384], sizes = [8, 128], strides = [1, 1]} : vector<8x512xf32> to vector<8x128xf32>
    %cst_63 = arith.constant 5.000000e-01 : f32
    %174 = vector.broadcast %cst_63 : f32 to vector<8x128xf32>
    %175 = arith.mulf %174, %173 : vector<8x128xf32>
    %176 = math.tanh %175 : vector<8x128xf32>
    %cst_64 = arith.constant 5.000000e-01 : f32
    %177 = vector.broadcast %cst_64 : f32 to vector<8x128xf32>
    %178 = arith.mulf %177, %176 : vector<8x128xf32>
    %cst_65 = arith.constant 5.000000e-01 : f32
    %179 = vector.broadcast %cst_65 : f32 to vector<8x128xf32>
    %180 = arith.addf %178, %179 : vector<8x128xf32>
    %181 = arith.mulf %170, %147 : vector<8x128xf32>
    %182 = arith.mulf %162, %172 : vector<8x128xf32>
    %183 = arith.addf %181, %182 : vector<8x128xf32>
    %184 = math.tanh %183 : vector<8x128xf32>
    %185 = arith.mulf %180, %184 : vector<8x128xf32>
    %c5_i32 = arith.constant 5 : i32
    %186 = arith.index_cast %c5_i32 : i32 to index
    %c0_66 = arith.constant 0 : index
    %c0_67 = arith.constant 0 : index
    %187 = vector.load %arg2[%186, %c0_66, %c0_67] : memref<8x8x512xf32, #tpu.memory_space<vmem>>, vector<1x8x512xf32>
    %188 = vector.shape_cast %187 : vector<1x8x512xf32> to vector<8x512xf32>
    %cst_68 = arith.constant dense<0.000000e+00> : vector<8x512xf32>
    %189 = tpu.matmul %185, %3, %cst_68 {dimension_numbers = #tpu.dot_dimension_numbers<[1], [0], [0], [1], [0, 0, 1, 1], [], []>} : vector<8x128xf32>, vector<128x512xf32>, vector<8x512xf32> -> vector<8x512xf32>
    %190 = arith.addf %188, %189 : vector<8x512xf32>
    %191 = vector.extract_strided_slice %190 {offsets = [0, 0], sizes = [8, 128], strides = [1, 1]} : vector<8x512xf32> to vector<8x128xf32>
    %cst_69 = arith.constant 5.000000e-01 : f32
    %192 = vector.broadcast %cst_69 : f32 to vector<8x128xf32>
    %193 = arith.mulf %192, %191 : vector<8x128xf32>
    %194 = math.tanh %193 : vector<8x128xf32>
    %cst_70 = arith.constant 5.000000e-01 : f32
    %195 = vector.broadcast %cst_70 : f32 to vector<8x128xf32>
    %196 = arith.mulf %195, %194 : vector<8x128xf32>
    %cst_71 = arith.constant 5.000000e-01 : f32
    %197 = vector.broadcast %cst_71 : f32 to vector<8x128xf32>
    %198 = arith.addf %196, %197 : vector<8x128xf32>
    %199 = vector.extract_strided_slice %190 {offsets = [0, 128], sizes = [8, 128], strides = [1, 1]} : vector<8x512xf32> to vector<8x128xf32>
    %cst_72 = arith.constant 5.000000e-01 : f32
    %200 = vector.broadcast %cst_72 : f32 to vector<8x128xf32>
    %201 = arith.mulf %200, %199 : vector<8x128xf32>
    %202 = math.tanh %201 : vector<8x128xf32>
    %cst_73 = arith.constant 5.000000e-01 : f32
    %203 = vector.broadcast %cst_73 : f32 to vector<8x128xf32>
    %204 = arith.mulf %203, %202 : vector<8x128xf32>
    %cst_74 = arith.constant 5.000000e-01 : f32
    %205 = vector.broadcast %cst_74 : f32 to vector<8x128xf32>
    %206 = arith.addf %204, %205 : vector<8x128xf32>
    %207 = vector.extract_strided_slice %190 {offsets = [0, 256], sizes = [8, 128], strides = [1, 1]} : vector<8x512xf32> to vector<8x128xf32>
    %208 = math.tanh %207 : vector<8x128xf32>
    %209 = vector.extract_strided_slice %190 {offsets = [0, 384], sizes = [8, 128], strides = [1, 1]} : vector<8x512xf32> to vector<8x128xf32>
    %cst_75 = arith.constant 5.000000e-01 : f32
    %210 = vector.broadcast %cst_75 : f32 to vector<8x128xf32>
    %211 = arith.mulf %210, %209 : vector<8x128xf32>
    %212 = math.tanh %211 : vector<8x128xf32>
    %cst_76 = arith.constant 5.000000e-01 : f32
    %213 = vector.broadcast %cst_76 : f32 to vector<8x128xf32>
    %214 = arith.mulf %213, %212 : vector<8x128xf32>
    %cst_77 = arith.constant 5.000000e-01 : f32
    %215 = vector.broadcast %cst_77 : f32 to vector<8x128xf32>
    %216 = arith.addf %214, %215 : vector<8x128xf32>
    %217 = arith.mulf %206, %183 : vector<8x128xf32>
    %218 = arith.mulf %198, %208 : vector<8x128xf32>
    %219 = arith.addf %217, %218 : vector<8x128xf32>
    %220 = math.tanh %219 : vector<8x128xf32>
    %221 = arith.mulf %216, %220 : vector<8x128xf32>
    %c6_i32 = arith.constant 6 : i32
    %222 = arith.index_cast %c6_i32 : i32 to index
    %c0_78 = arith.constant 0 : index
    %c0_79 = arith.constant 0 : index
    %223 = vector.load %arg2[%222, %c0_78, %c0_79] : memref<8x8x512xf32, #tpu.memory_space<vmem>>, vector<1x8x512xf32>
    %224 = vector.shape_cast %223 : vector<1x8x512xf32> to vector<8x512xf32>
    %cst_80 = arith.constant dense<0.000000e+00> : vector<8x512xf32>
    %225 = tpu.matmul %221, %3, %cst_80 {dimension_numbers = #tpu.dot_dimension_numbers<[1], [0], [0], [1], [0, 0, 1, 1], [], []>} : vector<8x128xf32>, vector<128x512xf32>, vector<8x512xf32> -> vector<8x512xf32>
    %226 = arith.addf %224, %225 : vector<8x512xf32>
    %227 = vector.extract_strided_slice %226 {offsets = [0, 0], sizes = [8, 128], strides = [1, 1]} : vector<8x512xf32> to vector<8x128xf32>
    %cst_81 = arith.constant 5.000000e-01 : f32
    %228 = vector.broadcast %cst_81 : f32 to vector<8x128xf32>
    %229 = arith.mulf %228, %227 : vector<8x128xf32>
    %230 = math.tanh %229 : vector<8x128xf32>
    %cst_82 = arith.constant 5.000000e-01 : f32
    %231 = vector.broadcast %cst_82 : f32 to vector<8x128xf32>
    %232 = arith.mulf %231, %230 : vector<8x128xf32>
    %cst_83 = arith.constant 5.000000e-01 : f32
    %233 = vector.broadcast %cst_83 : f32 to vector<8x128xf32>
    %234 = arith.addf %232, %233 : vector<8x128xf32>
    %235 = vector.extract_strided_slice %226 {offsets = [0, 128], sizes = [8, 128], strides = [1, 1]} : vector<8x512xf32> to vector<8x128xf32>
    %cst_84 = arith.constant 5.000000e-01 : f32
    %236 = vector.broadcast %cst_84 : f32 to vector<8x128xf32>
    %237 = arith.mulf %236, %235 : vector<8x128xf32>
    %238 = math.tanh %237 : vector<8x128xf32>
    %cst_85 = arith.constant 5.000000e-01 : f32
    %239 = vector.broadcast %cst_85 : f32 to vector<8x128xf32>
    %240 = arith.mulf %239, %238 : vector<8x128xf32>
    %cst_86 = arith.constant 5.000000e-01 : f32
    %241 = vector.broadcast %cst_86 : f32 to vector<8x128xf32>
    %242 = arith.addf %240, %241 : vector<8x128xf32>
    %243 = vector.extract_strided_slice %226 {offsets = [0, 256], sizes = [8, 128], strides = [1, 1]} : vector<8x512xf32> to vector<8x128xf32>
    %244 = math.tanh %243 : vector<8x128xf32>
    %245 = vector.extract_strided_slice %226 {offsets = [0, 384], sizes = [8, 128], strides = [1, 1]} : vector<8x512xf32> to vector<8x128xf32>
    %cst_87 = arith.constant 5.000000e-01 : f32
    %246 = vector.broadcast %cst_87 : f32 to vector<8x128xf32>
    %247 = arith.mulf %246, %245 : vector<8x128xf32>
    %248 = math.tanh %247 : vector<8x128xf32>
    %cst_88 = arith.constant 5.000000e-01 : f32
    %249 = vector.broadcast %cst_88 : f32 to vector<8x128xf32>
    %250 = arith.mulf %249, %248 : vector<8x128xf32>
    %cst_89 = arith.constant 5.000000e-01 : f32
    %251 = vector.broadcast %cst_89 : f32 to vector<8x128xf32>
    %252 = arith.addf %250, %251 : vector<8x128xf32>
    %253 = arith.mulf %242, %219 : vector<8x128xf32>
    %254 = arith.mulf %234, %244 : vector<8x128xf32>
    %255 = arith.addf %253, %254 : vector<8x128xf32>
    %256 = math.tanh %255 : vector<8x128xf32>
    %257 = arith.mulf %252, %256 : vector<8x128xf32>
    %c7_i32 = arith.constant 7 : i32
    %258 = arith.index_cast %c7_i32 : i32 to index
    %c0_90 = arith.constant 0 : index
    %c0_91 = arith.constant 0 : index
    %259 = vector.load %arg2[%258, %c0_90, %c0_91] : memref<8x8x512xf32, #tpu.memory_space<vmem>>, vector<1x8x512xf32>
    %260 = vector.shape_cast %259 : vector<1x8x512xf32> to vector<8x512xf32>
    %cst_92 = arith.constant dense<0.000000e+00> : vector<8x512xf32>
    %261 = tpu.matmul %257, %3, %cst_92 {dimension_numbers = #tpu.dot_dimension_numbers<[1], [0], [0], [1], [0, 0, 1, 1], [], []>} : vector<8x128xf32>, vector<128x512xf32>, vector<8x512xf32> -> vector<8x512xf32>
    %262 = arith.addf %260, %261 : vector<8x512xf32>
    %263 = vector.extract_strided_slice %262 {offsets = [0, 0], sizes = [8, 128], strides = [1, 1]} : vector<8x512xf32> to vector<8x128xf32>
    %cst_93 = arith.constant 5.000000e-01 : f32
    %264 = vector.broadcast %cst_93 : f32 to vector<8x128xf32>
    %265 = arith.mulf %264, %263 : vector<8x128xf32>
    %266 = math.tanh %265 : vector<8x128xf32>
    %cst_94 = arith.constant 5.000000e-01 : f32
    %267 = vector.broadcast %cst_94 : f32 to vector<8x128xf32>
    %268 = arith.mulf %267, %266 : vector<8x128xf32>
    %cst_95 = arith.constant 5.000000e-01 : f32
    %269 = vector.broadcast %cst_95 : f32 to vector<8x128xf32>
    %270 = arith.addf %268, %269 : vector<8x128xf32>
    %271 = vector.extract_strided_slice %262 {offsets = [0, 128], sizes = [8, 128], strides = [1, 1]} : vector<8x512xf32> to vector<8x128xf32>
    %cst_96 = arith.constant 5.000000e-01 : f32
    %272 = vector.broadcast %cst_96 : f32 to vector<8x128xf32>
    %273 = arith.mulf %272, %271 : vector<8x128xf32>
    %274 = math.tanh %273 : vector<8x128xf32>
    %cst_97 = arith.constant 5.000000e-01 : f32
    %275 = vector.broadcast %cst_97 : f32 to vector<8x128xf32>
    %276 = arith.mulf %275, %274 : vector<8x128xf32>
    %cst_98 = arith.constant 5.000000e-01 : f32
    %277 = vector.broadcast %cst_98 : f32 to vector<8x128xf32>
    %278 = arith.addf %276, %277 : vector<8x128xf32>
    %279 = vector.extract_strided_slice %262 {offsets = [0, 256], sizes = [8, 128], strides = [1, 1]} : vector<8x512xf32> to vector<8x128xf32>
    %280 = math.tanh %279 : vector<8x128xf32>
    %281 = vector.extract_strided_slice %262 {offsets = [0, 384], sizes = [8, 128], strides = [1, 1]} : vector<8x512xf32> to vector<8x128xf32>
    %cst_99 = arith.constant 5.000000e-01 : f32
    %282 = vector.broadcast %cst_99 : f32 to vector<8x128xf32>
    %283 = arith.mulf %282, %281 : vector<8x128xf32>
    %284 = math.tanh %283 : vector<8x128xf32>
    %cst_100 = arith.constant 5.000000e-01 : f32
    %285 = vector.broadcast %cst_100 : f32 to vector<8x128xf32>
    %286 = arith.mulf %285, %284 : vector<8x128xf32>
    %cst_101 = arith.constant 5.000000e-01 : f32
    %287 = vector.broadcast %cst_101 : f32 to vector<8x128xf32>
    %288 = arith.addf %286, %287 : vector<8x128xf32>
    %289 = arith.mulf %278, %255 : vector<8x128xf32>
    %290 = arith.mulf %270, %280 : vector<8x128xf32>
    %291 = arith.addf %289, %290 : vector<8x128xf32>
    %292 = math.tanh %291 : vector<8x128xf32>
    %293 = arith.mulf %288, %292 : vector<8x128xf32>
    %c8_i32 = arith.constant 8 : i32
    %c0_102 = arith.constant 0 : index
    %c0_103 = arith.constant 0 : index
    %294 = vector.load %arg6[%c0_102, %c0_103] : memref<8x128xf32, #tpu.memory_space<vmem>>, vector<8x128xf32>
    tpu.vector_store %arg6[%c0_102, %c0_103], %293 {strides = array<i32>} : memref<8x128xf32, #tpu.memory_space<vmem>>, vector<8x128xf32>,
    %c0_104 = arith.constant 0 : index
    %c0_105 = arith.constant 0 : index
    %295 = vector.load %arg7[%c0_104, %c0_105] : memref<8x128xf32, #tpu.memory_space<vmem>>, vector<8x128xf32>
    tpu.vector_store %arg7[%c0_104, %c0_105], %291 {strides = array<i32>} : memref<8x128xf32, #tpu.memory_space<vmem>>, vector<8x128xf32>,
    %c0_i32_106 = arith.constant 0 : i32
    %296 = arith.cmpi eq, %arg1, %c0_i32_106 : i32
    %297 = arith.extui %296 : i1 to i32
    %c0_i32_107 = arith.constant 0 : i32
    %298 = arith.cmpi ne, %297, %c0_i32_107 : i32
    scf.if %298 {
      %c0_108 = arith.constant 0 : index
      %c0_109 = arith.constant 0 : index
      %299 = vector.load %arg6[%c0_108, %c0_109] : memref<8x128xf32, #tpu.memory_space<vmem>>, vector<8x128xf32>
      %c0_110 = arith.constant 0 : index
      %c0_111 = arith.constant 0 : index
      %300 = vector.load %arg4[%c0_110, %c0_111] : memref<8x128xf32, #tpu.memory_space<vmem>>, vector<8x128xf32>
      tpu.vector_store %arg4[%c0_110, %c0_111], %299 {strides = array<i32>} : memref<8x128xf32, #tpu.memory_space<vmem>>, vector<8x128xf32>,
      %c0_112 = arith.constant 0 : index
      %c0_113 = arith.constant 0 : index
      %301 = vector.load %arg7[%c0_112, %c0_113] : memref<8x128xf32, #tpu.memory_space<vmem>>, vector<8x128xf32>
      %c0_114 = arith.constant 0 : index
      %c0_115 = arith.constant 0 : index
      %302 = vector.load %arg5[%c0_114, %c0_115] : memref<8x128xf32, #tpu.memory_space<vmem>>, vector<8x128xf32>
      tpu.vector_store %arg5[%c0_114, %c0_115], %301 {strides = array<i32>} : memref<8x128xf32, #tpu.memory_space<vmem>>, vector<8x128xf32>,
    } else {
    }
    return
  }
  func.func @transform_0(%arg0: i32, %arg1: i32) -> (i32, i32, i32) {
    %c0_i32 = arith.constant 0 : i32
    %c0_i32_0 = arith.constant 0 : i32
    return %arg1, %arg0, %c0_i32 : i32, i32, i32
  }
  func.func @transform_1(%arg0: i32, %arg1: i32) -> (i32, i32) {
    %c0_i32 = arith.constant 0 : i32
    %c0_i32_0 = arith.constant 0 : i32
    %c0_i32_1 = arith.constant 0 : i32
    return %c0_i32, %c0_i32_0 : i32, i32
  }
  func.func @transform_2(%arg0: i32, %arg1: i32) -> (i32, i32) {
    %c0_i32 = arith.constant 0 : i32
    %c0_i32_0 = arith.constant 0 : i32
    return %arg0, %c0_i32 : i32, i32
  }
  func.func @transform_3(%arg0: i32, %arg1: i32) -> (i32, i32) {
    %c0_i32 = arith.constant 0 : i32
    %c0_i32_0 = arith.constant 0 : i32
    return %arg0, %c0_i32 : i32, i32
  }
}

</mosaic_0001>

<llo_original>
// kernel: tpu_custom_call.1
$region0: #{tpu_custom_call.1}
  #allocation0 [shape = 'u32[]', space=smem, size = 0x4, offset = 0x4, fixed_abs, tag = 'smem constant byte address 0x4 - core index']
  #allocation1 [shape = 'u32[72,128]{1,0:T(1,128)}', space=vmem, size = 0x9000, scoped, tag = 'internal scratch']
  #allocation2 [shape = 'f32[8,128]{1,0:T(8,128)}', space=vmem, size = 0x1000, scoped, tag = 'scratch operand']
  #allocation3 [shape = 'f32[8,128]{1,0:T(8,128)}', space=vmem, size = 0x1000, scoped, tag = 'scratch operand']
  %s0 = inlined_call_operand.hbm [shape: f32[8,8,512], index: 0, kind: input, shape index: {}]
  %s1 = inlined_call_operand.hbm [shape: f32[128,512], index: 1, kind: input, shape index: {}]
  %s2 = inlined_call_operand.hbm [shape: f32[8,128], index: 2, kind: output, shape index: {0}]
  %s3 = inlined_call_operand.hbm [shape: f32[8,128], index: 3, kind: output, shape index: {1}]
  %4 = xla_tuple %s2, %s3
  %s5 = sld [smem:[#allocation0]]
  $region42: #{tpu_custom_call.1} parent=0
    _
  %s7 = ssub.s32 1, %s5
  %s8 = scalar_select 0, %s7, %s5
  $region1: #{tpu_custom_call.1} parent=0
    #allocation4 [shape = 'u8[131072]{0}', space=vmem, size = 0x20000, scoped, tag = 'input window, operand 0, single buffered']
    #allocation5 [shape = 's32[1]{0}', space=sflag, size = 0x4, scoped, tag = 'scoped memory for tpu_custom_call.1']
    #allocation6 [shape = 's32[1]{0}', space=sflag, size = 0x4, scoped, tag = 'scoped memory for tpu_custom_call.1']
    #allocation7 [shape = 'u8[262144]{0}', space=vmem, size = 0x40000, scoped, tag = 'input window, operand 1, single buffered']
    #allocation8 [shape = 's32[1]{0}', space=sflag, size = 0x4, scoped, tag = 'scoped memory for tpu_custom_call.1']
    #allocation9 [shape = 'u8[4096]{0}', space=vmem, size = 0x1000, scoped, tag = 'output window, operand 0, single buffered']
    #allocation10 [shape = 'u8[4096]{0}', space=vmem, size = 0x1000, scoped, tag = 'output window, operand 1, single buffered']
    #allocation11 [shape = 's32[1]{0}', space=sflag, size = 0x4, scoped, tag = 'scoped memory for tpu_custom_call.1']
    %9 = vsyncpa [#allocation5], 0
    %10 = vsyncpa [#allocation8], 0
    %11 = vsyncpa [#allocation6], 0
    %12 = vsyncpa [#allocation11], 0
    // Predicated region
    $region2: #{tpu_custom_call.1} parent=1 // pred_check
      _
    $region3: #{tpu_custom_call.1} parent=1 // pred_check_branch
      %14 = sbr.rel (0) target = $region5
    $region4: #{tpu_custom_call.1} parent=1 // pred_region
      %16 = vsyncadd [#allocation5], 0
      %s17 = sshll.u32 %s0, 4
      %s18 = int_to_ptr.hbm [resolvable:$true] %s17
      %s19 = sshll.u32 [#allocation4], 4
      %s20 = int_to_ptr.vmem [resolvable:$true] %s19
      %25 = dma.hbm_to_vmem [thread:$0]  %s18, 4096, %s20, [#allocation5], 512, 512, 32
    $region5: #{tpu_custom_call.1} parent=1 // pred_fallthru
      _
    // Predicated region
    $region6: #{tpu_custom_call.1} parent=1 // pred_check
      _
    $region7: #{tpu_custom_call.1} parent=1 // pred_check_branch
      %27 = sbr.rel (0) target = $region9
    $region8: #{tpu_custom_call.1} parent=1 // pred_region
      %29 = vsyncadd [#allocation8], 0
      %s30 = sshll.u32 %s1, 4
      %s31 = int_to_ptr.hbm [resolvable:$true] %s30
      %s32 = sshll.u32 [#allocation7], 4
      %s33 = int_to_ptr.vmem [resolvable:$true] %s32
      %38 = dma.hbm_to_vmem [thread:$0]  %s31, 8192, %s33, [#allocation8], 512, 512, 32
    $region9: #{tpu_custom_call.1} parent=1 // pred_fallthru
      _
    // Predicated region
    $region10: #{tpu_custom_call.1} parent=1 // pred_check
      _
    $region11: #{tpu_custom_call.1} parent=1 // pred_check_branch
      %40 = sbr.rel (0) target = $region13
    $region12: #{tpu_custom_call.1} parent=1 // pred_region
      %42 = dma.done [#allocation5], 4096
    $region13: #{tpu_custom_call.1} parent=1 // pred_fallthru
      _
    // Predicated region
    $region14: #{tpu_custom_call.1} parent=1 // pred_check
      _
    $region15: #{tpu_custom_call.1} parent=1 // pred_check_branch
      %44 = sbr.rel (0) target = $region17
    $region16: #{tpu_custom_call.1} parent=1 // pred_region
      %46 = dma.done [#allocation8], 8192
    $region17: #{tpu_custom_call.1} parent=1 // pred_fallthru
      _
    %p47 = scmp.eq.s32.totalorder 0, 0
    // Predicated region
    $region18: #{tpu_custom_call.1} parent=1 // pred_check
      %p48 = pneg %p47
    $region19: #{tpu_custom_call.1} parent=1 // pred_check_branch
      %50 = sbr.rel (%p48) target = $region21
    $region20: #{tpu_custom_call.1} parent=1 // pred_region
      %51 = vst [vmem:[#allocation2] sm:$0xff] 0.0
      %52 = vst [vmem:[#allocation3] sm:$0xff] 0.0
    $region21: #{tpu_custom_call.1} parent=1 // pred_fallthru
      _
    %v53 = vld [vmem:[#allocation7] sm:$0xff]
    %v54 = vld [vmem:[#allocation7 + $0x8] sm:$0xff]
    %v55 = vld [vmem:[#allocation7 + $0x10] sm:$0xff]
    %v56 = vld [vmem:[#allocation7 + $0x18] sm:$0xff]
    %v57 = vld [vmem:[#allocation7 + $0x20] sm:$0xff]
    %v58 = vld [vmem:[#allocation7 + $0x28] sm:$0xff]
    %v59 = vld [vmem:[#allocation7 + $0x30] sm:$0xff]
    %v60 = vld [vmem:[#allocation7 + $0x38] sm:$0xff]
    %v61 = vld [vmem:[#allocation7 + $0x40] sm:$0xff]
    %v62 = vld [vmem:[#allocation7 + $0x48] sm:$0xff]
    %v63 = vld [vmem:[#allocation7 + $0x50] sm:$0xff]
    %v64 = vld [vmem:[#allocation7 + $0x58] sm:$0xff]
    %v65 = vld [vmem:[#allocation7 + $0x60] sm:$0xff]
    %v66 = vld [vmem:[#allocation7 + $0x68] sm:$0xff]
    %v67 = vld [vmem:[#allocation7 + $0x70] sm:$0xff]
    %v68 = vld [vmem:[#allocation7 + $0x78] sm:$0xff]
    %v69 = vld [vmem:[#allocation7 + $0x80] sm:$0xff]
    %v70 = vld [vmem:[#allocation7 + $0x88] sm:$0xff]
    %v71 = vld [vmem:[#allocation7 + $0x90] sm:$0xff]
    %v72 = vld [vmem:[#allocation7 + $0x98] sm:$0xff]
    %v73 = vld [vmem:[#allocation7 + $0xa0] sm:$0xff]
    %v74 = vld [vmem:[#allocation7 + $0xa8] sm:$0xff]
    %v75 = vld [vmem:[#allocation7 + $0xb0] sm:$0xff]
    %v76 = vld [vmem:[#allocation7 + $0xb8] sm:$0xff]
    %v77 = vld [vmem:[#allocation7 + $0xc0] sm:$0xff]
    %v78 = vld [vmem:[#allocation7 + $0xc8] sm:$0xff]
    %v79 = vld [vmem:[#allocation7 + $0xd0] sm:$0xff]
    %v80 = vld [vmem:[#allocation7 + $0xd8] sm:$0xff]
    %v81 = vld [vmem:[#allocation7 + $0xe0] sm:$0xff]
    %v82 = vld [vmem:[#allocation7 + $0xe8] sm:$0xff]
    %v83 = vld [vmem:[#allocation7 + $0xf0] sm:$0xff]
    %v84 = vld [vmem:[#allocation7 + $0xf8] sm:$0xff]
    %v85 = vld [vmem:[#allocation7 + $0x100] sm:$0xff]
    %v86 = vld [vmem:[#allocation7 + $0x108] sm:$0xff]
    %v87 = vld [vmem:[#allocation7 + $0x110] sm:$0xff]
    %v88 = vld [vmem:[#allocation7 + $0x118] sm:$0xff]
    %v89 = vld [vmem:[#allocation7 + $0x120] sm:$0xff]
    %v90 = vld [vmem:[#allocation7 + $0x128] sm:$0xff]
    %v91 = vld [vmem:[#allocation7 + $0x130] sm:$0xff]
    %v92 = vld [vmem:[#allocation7 + $0x138] sm:$0xff]
    %v93 = vld [vmem:[#allocation7 + $0x140] sm:$0xff]
    %v94 = vld [vmem:[#allocation7 + $0x148] sm:$0xff]
    %v95 = vld [vmem:[#allocation7 + $0x150] sm:$0xff]
    %v96 = vld [vmem:[#allocation7 + $0x158] sm:$0xff]
    %v97 = vld [vmem:[#allocation7 + $0x160] sm:$0xff]
    %v98 = vld [vmem:[#allocation7 + $0x168] sm:$0xff]
    %v99 = vld [vmem:[#allocation7 + $0x170] sm:$0xff]
    %v100 = vld [vmem:[#allocation7 + $0x178] sm:$0xff]
    %v101 = vld [vmem:[#allocation7 + $0x180] sm:$0xff]
    %v102 = vld [vmem:[#allocation7 + $0x188] sm:$0xff]
    %v103 = vld [vmem:[#allocation7 + $0x190] sm:$0xff]
    %v104 = vld [vmem:[#allocation7 + $0x198] sm:$0xff]
    %v105 = vld [vmem:[#allocation7 + $0x1a0] sm:$0xff]
    %v106 = vld [vmem:[#allocation7 + $0x1a8] sm:$0xff]
    %v107 = vld [vmem:[#allocation7 + $0x1b0] sm:$0xff]
    %v108 = vld [vmem:[#allocation7 + $0x1b8] sm:$0xff]
    %v109 = vld [vmem:[#allocation7 + $0x1c0] sm:$0xff]
    %v110 = vld [vmem:[#allocation7 + $0x1c8] sm:$0xff]
    %v111 = vld [vmem:[#allocation7 + $0x1d0] sm:$0xff]
    %v112 = vld [vmem:[#allocation7 + $0x1d8] sm:$0xff]
    %v113 = vld [vmem:[#allocation7 + $0x1e0] sm:$0xff]
    %v114 = vld [vmem:[#allocation7 + $0x1e8] sm:$0xff]
    %v115 = vld [vmem:[#allocation7 + $0x1f0] sm:$0xff]
    %v116 = vld [vmem:[#allocation7 + $0x1f8] sm:$0xff]
    %v117 = vld [vmem:[#allocation2] sm:$0xff]
    %v118 = vld [vmem:[#allocation3] sm:$0xff]
    %v119 = vld [vmem:[#allocation4] sm:$0xff]
    %v120 = vld [vmem:[#allocation4 + $0x8] sm:$0xff]
    %v121 = vld [vmem:[#allocation4 + $0x10] sm:$0xff]
    %v122 = vld [vmem:[#allocation4 + $0x18] sm:$0xff]
    %123 = vmatpush.msra.mxu0 %v113
    %124 = vmatpush.msra.mxu0 %v109
    %125 = vmatpush.msra.mxu0 %v105
    %126 = vmatpush.msra.mxu0 %v101
    %127 = vmatpush.msra.mxu0 %v97
    %128 = vmatpush.msra.mxu0 %v93
    %129 = vmatpush.msra.mxu0 %v89
    %130 = vmatpush.msra.mxu0 %v85
    %131 = vmatpush.msra.mxu0 %v81
    %132 = vmatpush.msra.mxu0 %v77
    %133 = vmatpush.msra.mxu0 %v73
    %134 = vmatpush.msra.mxu0 %v69
    %135 = vmatpush.msra.mxu0 %v65
    %136 = vmatpush.msra.mxu0 %v61
    %137 = vmatpush.msra.mxu0 %v57
    %138 = vmatpush.msra.mxu0 %v53
    %139 = vmatmul.f32.gmra.mxu0 %v117
    %v140 = vpop.f32.mrf.mxu0
    %v141 = vadd.f32 0.0, %v140
    %142 = vdwg.mxu0
    %143 = vmatpush.msra.mxu0 %v114
    %144 = vmatpush.msra.mxu0 %v110
    %145 = vmatpush.msra.mxu0 %v106
    %146 = vmatpush.msra.mxu0 %v102
    %147 = vmatpush.msra.mxu0 %v98
    %148 = vmatpush.msra.mxu0 %v94
    %149 = vmatpush.msra.mxu0 %v90
    %150 = vmatpush.msra.mxu0 %v86
    %151 = vmatpush.msra.mxu0 %v82
    %152 = vmatpush.msra.mxu0 %v78
    %153 = vmatpush.msra.mxu0 %v74
    %154 = vmatpush.msra.mxu0 %v70
    %155 = vmatpush.msra.mxu0 %v66
    %156 = vmatpush.msra.mxu0 %v62
    %157 = vmatpush.msra.mxu0 %v58
    %158 = vmatpush.msra.mxu0 %v54
    %159 = vmatmul.f32.gmra.mxu0 %v117
    %v160 = vpop.f32.mrf.mxu0
    %v161 = vadd.f32 0.0, %v160
    %162 = vdwg.mxu0
    %163 = vmatpush.msra.mxu0 %v115
    %164 = vmatpush.msra.mxu0 %v111
    %165 = vmatpush.msra.mxu0 %v107
    %166 = vmatpush.msra.mxu0 %v103
    %167 = vmatpush.msra.mxu0 %v99
    %168 = vmatpush.msra.mxu0 %v95
    %169 = vmatpush.msra.mxu0 %v91
    %170 = vmatpush.msra.mxu0 %v87
    %171 = vmatpush.msra.mxu0 %v83
    %172 = vmatpush.msra.mxu0 %v79
    %173 = vmatpush.msra.mxu0 %v75
    %174 = vmatpush.msra.mxu0 %v71
    %175 = vmatpush.msra.mxu0 %v67
    %176 = vmatpush.msra.mxu0 %v63
    %177 = vmatpush.msra.mxu0 %v59
    %178 = vmatpush.msra.mxu0 %v55
    %179 = vmatmul.f32.gmra.mxu0 %v117
    %v180 = vpop.f32.mrf.mxu0
    %v181 = vadd.f32 0.0, %v180
    %182 = vdwg.mxu0
    %183 = vmatpush.msra.mxu0 %v116
    %184 = vmatpush.msra.mxu0 %v112
    %185 = vmatpush.msra.mxu0 %v108
    %186 = vmatpush.msra.mxu0 %v104
    %187 = vmatpush.msra.mxu0 %v100
    %188 = vmatpush.msra.mxu0 %v96
    %189 = vmatpush.msra.mxu0 %v92
    %190 = vmatpush.msra.mxu0 %v88
    %191 = vmatpush.msra.mxu0 %v84
    %192 = vmatpush.msra.mxu0 %v80
    %193 = vmatpush.msra.mxu0 %v76
    %194 = vmatpush.msra.mxu0 %v72
    %195 = vmatpush.msra.mxu0 %v68
    %196 = vmatpush.msra.mxu0 %v64
    %197 = vmatpush.msra.mxu0 %v60
    %198 = vmatpush.msra.mxu0 %v56
    %199 = vmatmul.f32.gmra.mxu0 %v117
    %v200 = vpop.f32.mrf.mxu0
    %v201 = vadd.f32 0.0, %v200
    %202 = vdwg.mxu0
    %v203 = vadd.f32 %v119, %v141
    %v204 = vadd.f32 %v120, %v161
    %v205 = vadd.f32 %v121, %v181
    %v206 = vadd.f32 %v122, %v201
    %v207 = vmul.f32 %v203, 0.5
    %v208 = vtanh.pop %v207
    %v209 = vmul.f32 %v208, 0.5
    %v210 = vadd.f32 %v209, 0.5
    %v211 = vmul.f32 %v204, 0.5
    %v212 = vtanh.pop %v211
    %v213 = vmul.f32 %v212, 0.5
    %v214 = vadd.f32 %v213, 0.5
    %v215 = vtanh.pop %v205
    %v216 = vmul.f32 %v206, 0.5
    %v217 = vtanh.pop %v216
    %v218 = vmul.f32 %v217, 0.5
    %v219 = vadd.f32 %v218, 0.5
    %v220 = vmul.f32 %v214, %v118
    %v221 = vmul.f32 %v210, %v215
    %v222 = vadd.f32 %v220, %v221
    %v223 = vtanh.pop %v222
    %v224 = vmul.f32 %v219, %v223
    %s225 = scalar_lea.vmem [#allocation4], 32
    %v226 = vld [vmem:[%s225] sm:$0xff]
    %v227 = vld [vmem:[%s225 + $0x8] sm:$0xff]
    %v228 = vld [vmem:[%s225 + $0x10] sm:$0xff]
    %v229 = vld [vmem:[%s225 + $0x18] sm:$0xff]
    %230 = vmatpush.msra.mxu0 %v113
    %231 = vmatpush.msra.mxu0 %v109
    %232 = vmatpush.msra.mxu0 %v105
    %233 = vmatpush.msra.mxu0 %v101
    %234 = vmatpush.msra.mxu0 %v97
    %235 = vmatpush.msra.mxu0 %v93
    %236 = vmatpush.msra.mxu0 %v89
    %237 = vmatpush.msra.mxu0 %v85
    %238 = vmatpush.msra.mxu0 %v81
    %239 = vmatpush.msra.mxu0 %v77
    %240 = vmatpush.msra.mxu0 %v73
    %241 = vmatpush.msra.mxu0 %v69
    %242 = vmatpush.msra.mxu0 %v65
    %243 = vmatpush.msra.mxu0 %v61
    %244 = vmatpush.msra.mxu0 %v57
    %245 = vmatpush.msra.mxu0 %v53
    %246 = vmatmul.f32.gmra.mxu0 %v224
    %v247 = vpop.f32.mrf.mxu0
    %v248 = vadd.f32 0.0, %v247
    %249 = vdwg.mxu0
    %250 = vmatpush.msra.mxu0 %v114
    %251 = vmatpush.msra.mxu0 %v110
    %252 = vmatpush.msra.mxu0 %v106
    %253 = vmatpush.msra.mxu0 %v102
    %254 = vmatpush.msra.mxu0 %v98
    %255 = vmatpush.msra.mxu0 %v94
    %256 = vmatpush.msra.mxu0 %v90
    %257 = vmatpush.msra.mxu0 %v86
    %258 = vmatpush.msra.mxu0 %v82
    %259 = vmatpush.msra.mxu0 %v78
    %260 = vmatpush.msra.mxu0 %v74
    %261 = vmatpush.msra.mxu0 %v70
    %262 = vmatpush.msra.mxu0 %v66
    %263 = vmatpush.msra.mxu0 %v62
    %264 = vmatpush.msra.mxu0 %v58
    %265 = vmatpush.msra.mxu0 %v54
    %266 = vmatmul.f32.gmra.mxu0 %v224
    %v267 = vpop.f32.mrf.mxu0
    %v268 = vadd.f32 0.0, %v267
    %269 = vdwg.mxu0
    %270 = vmatpush.msra.mxu0 %v115
    %271 = vmatpush.msra.mxu0 %v111
    %272 = vmatpush.msra.mxu0 %v107
    %273 = vmatpush.msra.mxu0 %v103
    %274 = vmatpush.msra.mxu0 %v99
    %275 = vmatpush.msra.mxu0 %v95
    %276 = vmatpush.msra.mxu0 %v91
    %277 = vmatpush.msra.mxu0 %v87
    %278 = vmatpush.msra.mxu0 %v83
    %279 = vmatpush.msra.mxu0 %v79
    %280 = vmatpush.msra.mxu0 %v75
    %281 = vmatpush.msra.mxu0 %v71
    %282 = vmatpush.msra.mxu0 %v67
    %283 = vmatpush.msra.mxu0 %v63
    %284 = vmatpush.msra.mxu0 %v59
    %285 = vmatpush.msra.mxu0 %v55
    %286 = vmatmul.f32.gmra.mxu0 %v224
    %v287 = vpop.f32.mrf.mxu0
    %v288 = vadd.f32 0.0, %v287
    %289 = vdwg.mxu0
    %290 = vmatpush.msra.mxu0 %v116
    %291 = vmatpush.msra.mxu0 %v112
    %292 = vmatpush.msra.mxu0 %v108
    %293 = vmatpush.msra.mxu0 %v104
    %294 = vmatpush.msra.mxu0 %v100
    %295 = vmatpush.msra.mxu0 %v96
    %296 = vmatpush.msra.mxu0 %v92
    %297 = vmatpush.msra.mxu0 %v88
    %298 = vmatpush.msra.mxu0 %v84
    %299 = vmatpush.msra.mxu0 %v80
    %300 = vmatpush.msra.mxu0 %v76
    %301 = vmatpush.msra.mxu0 %v72
    %302 = vmatpush.msra.mxu0 %v68
    %303 = vmatpush.msra.mxu0 %v64
    %304 = vmatpush.msra.mxu0 %v60
    %305 = vmatpush.msra.mxu0 %v56
    %306 = vmatmul.f32.gmra.mxu0 %v224
    %v307 = vpop.f32.mrf.mxu0
    %v308 = vadd.f32 0.0, %v307
    %309 = vdwg.mxu0
    %v310 = vadd.f32 %v226, %v248
    %v311 = vadd.f32 %v227, %v268
    %v312 = vadd.f32 %v228, %v288
    %v313 = vadd.f32 %v229, %v308
    %v314 = vmul.f32 %v310, 0.5
    %v315 = vtanh.pop %v314
    %v316 = vmul.f32 %v315, 0.5
    %v317 = vadd.f32 %v316, 0.5
    %v318 = vmul.f32 %v311, 0.5
    %v319 = vtanh.pop %v318
    %v320 = vmul.f32 %v319, 0.5
    %v321 = vadd.f32 %v320, 0.5
    %v322 = vtanh.pop %v312
    %v323 = vmul.f32 %v313, 0.5
    %v324 = vtanh.pop %v323
    %v325 = vmul.f32 %v324, 0.5
    %v326 = vadd.f32 %v325, 0.5
    %v327 = vmul.f32 %v321, %v222
    %v328 = vmul.f32 %v317, %v322
    %v329 = vadd.f32 %v327, %v328
    %v330 = vtanh.pop %v329
    %v331 = vmul.f32 %v326, %v330
    %s332 = scalar_lea.vmem [#allocation4], 64
    %v333 = vld [vmem:[%s332] sm:$0xff]
    %v334 = vld [vmem:[%s332 + $0x8] sm:$0xff]
    %v335 = vld [vmem:[%s332 + $0x10] sm:$0xff]
    %v336 = vld [vmem:[%s332 + $0x18] sm:$0xff]
    %337 = vmatpush.msra.mxu0 %v113
    %338 = vmatpush.msra.mxu0 %v109
    %339 = vmatpush.msra.mxu0 %v105
    %340 = vmatpush.msra.mxu0 %v101
    %341 = vmatpush.msra.mxu0 %v97
    %342 = vmatpush.msra.mxu0 %v93
    %343 = vmatpush.msra.mxu0 %v89
    %344 = vmatpush.msra.mxu0 %v85
    %345 = vmatpush.msra.mxu0 %v81
    %346 = vmatpush.msra.mxu0 %v77
    %347 = vmatpush.msra.mxu0 %v73
    %348 = vmatpush.msra.mxu0 %v69
    %349 = vmatpush.msra.mxu0 %v65
    %350 = vmatpush.msra.mxu0 %v61
    %351 = vmatpush.msra.mxu0 %v57
    %352 = vmatpush.msra.mxu0 %v53
    %353 = vmatmul.f32.gmra.mxu0 %v331
    %v354 = vpop.f32.mrf.mxu0
    %v355 = vadd.f32 0.0, %v354
    %356 = vdwg.mxu0
    %357 = vmatpush.msra.mxu0 %v114
    %358 = vmatpush.msra.mxu0 %v110
    %359 = vmatpush.msra.mxu0 %v106
    %360 = vmatpush.msra.mxu0 %v102
    %361 = vmatpush.msra.mxu0 %v98
    %362 = vmatpush.msra.mxu0 %v94
    %363 = vmatpush.msra.mxu0 %v90
    %364 = vmatpush.msra.mxu0 %v86
    %365 = vmatpush.msra.mxu0 %v82
    %366 = vmatpush.msra.mxu0 %v78
    %367 = vmatpush.msra.mxu0 %v74
    %368 = vmatpush.msra.mxu0 %v70
    %369 = vmatpush.msra.mxu0 %v66
    %370 = vmatpush.msra.mxu0 %v62
    %371 = vmatpush.msra.mxu0 %v58
    %372 = vmatpush.msra.mxu0 %v54
    %373 = vmatmul.f32.gmra.mxu0 %v331
    %v374 = vpop.f32.mrf.mxu0
    %v375 = vadd.f32 0.0, %v374
    %376 = vdwg.mxu0
    %377 = vmatpush.msra.mxu0 %v115
    %378 = vmatpush.msra.mxu0 %v111
    %379 = vmatpush.msra.mxu0 %v107
    %380 = vmatpush.msra.mxu0 %v103
    %381 = vmatpush.msra.mxu0 %v99
    %382 = vmatpush.msra.mxu0 %v95
    %383 = vmatpush.msra.mxu0 %v91
    %384 = vmatpush.msra.mxu0 %v87
    %385 = vmatpush.msra.mxu0 %v83
    %386 = vmatpush.msra.mxu0 %v79
    %387 = vmatpush.msra.mxu0 %v75
    %388 = vmatpush.msra.mxu0 %v71
    %389 = vmatpush.msra.mxu0 %v67
    %390 = vmatpush.msra.mxu0 %v63
    %391 = vmatpush.msra.mxu0 %v59
    %392 = vmatpush.msra.mxu0 %v55
    %393 = vmatmul.f32.gmra.mxu0 %v331
    %v394 = vpop.f32.mrf.mxu0
    %v395 = vadd.f32 0.0, %v394
    %396 = vdwg.mxu0
    %397 = vmatpush.msra.mxu0 %v116
    %398 = vmatpush.msra.mxu0 %v112
    %399 = vmatpush.msra.mxu0 %v108
    %400 = vmatpush.msra.mxu0 %v104
    %401 = vmatpush.msra.mxu0 %v100
    %402 = vmatpush.msra.mxu0 %v96
    %403 = vmatpush.msra.mxu0 %v92
    %404 = vmatpush.msra.mxu0 %v88
    %405 = vmatpush.msra.mxu0 %v84
    %406 = vmatpush.msra.mxu0 %v80
    %407 = vmatpush.msra.mxu0 %v76
    %408 = vmatpush.msra.mxu0 %v72
    %409 = vmatpush.msra.mxu0 %v68
    %410 = vmatpush.msra.mxu0 %v64
    %411 = vmatpush.msra.mxu0 %v60
    %412 = vmatpush.msra.mxu0 %v56
    %413 = vmatmul.f32.gmra.mxu0 %v331
    %v414 = vpop.f32.mrf.mxu0
    %v415 = vadd.f32 0.0, %v414
    %416 = vdwg.mxu0
    %v417 = vadd.f32 %v333, %v355
    %v418 = vadd.f32 %v334, %v375
    %v419 = vadd.f32 %v335, %v395
    %v420 = vadd.f32 %v336, %v415
    %v421 = vmul.f32 %v417, 0.5
    %v422 = vtanh.pop %v421
    %v423 = vmul.f32 %v422, 0.5
    %v424 = vadd.f32 %v423, 0.5
    %v425 = vmul.f32 %v418, 0.5
    %v426 = vtanh.pop %v425
    %v427 = vmul.f32 %v426, 0.5
    %v428 = vadd.f32 %v427, 0.5
    %v429 = vtanh.pop %v419
    %v430 = vmul.f32 %v420, 0.5
    %v431 = vtanh.pop %v430
    %v432 = vmul.f32 %v431, 0.5
    %v433 = vadd.f32 %v432, 0.5
    %v434 = vmul.f32 %v428, %v329
    %v435 = vmul.f32 %v424, %v429
    %v436 = vadd.f32 %v434, %v435
    %v437 = vtanh.pop %v436
    %v438 = vmul.f32 %v433, %v437
    %s439 = scalar_lea.vmem [#allocation4], 96
    %v440 = vld [vmem:[%s439] sm:$0xff]
    %v441 = vld [vmem:[%s439 + $0x8] sm:$0xff]
    %v442 = vld [vmem:[%s439 + $0x10] sm:$0xff]
    %v443 = vld [vmem:[%s439 + $0x18] sm:$0xff]
    %444 = vmatpush.msra.mxu0 %v113
    %445 = vmatpush.msra.mxu0 %v109
    %446 = vmatpush.msra.mxu0 %v105
    %447 = vmatpush.msra.mxu0 %v101
    %448 = vmatpush.msra.mxu0 %v97
    %449 = vmatpush.msra.mxu0 %v93
    %450 = vmatpush.msra.mxu0 %v89
    %451 = vmatpush.msra.mxu0 %v85
    %452 = vmatpush.msra.mxu0 %v81
    %453 = vmatpush.msra.mxu0 %v77
    %454 = vmatpush.msra.mxu0 %v73
    %455 = vmatpush.msra.mxu0 %v69
    %456 = vmatpush.msra.mxu0 %v65
    %457 = vmatpush.msra.mxu0 %v61
    %458 = vmatpush.msra.mxu0 %v57
    %459 = vmatpush.msra.mxu0 %v53
    %460 = vmatmul.f32.gmra.mxu0 %v438
    %v461 = vpop.f32.mrf.mxu0
    %v462 = vadd.f32 0.0, %v461
    %463 = vdwg.mxu0
    %464 = vmatpush.msra.mxu0 %v114
    %465 = vmatpush.msra.mxu0 %v110
    %466 = vmatpush.msra.mxu0 %v106
    %467 = vmatpush.msra.mxu0 %v102
    %468 = vmatpush.msra.mxu0 %v98
    %469 = vmatpush.msra.mxu0 %v94
    %470 = vmatpush.msra.mxu0 %v90
    %471 = vmatpush.msra.mxu0 %v86
    %472 = vmatpush.msra.mxu0 %v82
    %473 = vmatpush.msra.mxu0 %v78
    %474 = vmatpush.msra.mxu0 %v74
    %475 = vmatpush.msra.mxu0 %v70
    %476 = vmatpush.msra.mxu0 %v66
    %477 = vmatpush.msra.mxu0 %v62
    %478 = vmatpush.msra.mxu0 %v58
    %479 = vmatpush.msra.mxu0 %v54
    %480 = vmatmul.f32.gmra.mxu0 %v438
    %v481 = vpop.f32.mrf.mxu0
    %v482 = vadd.f32 0.0, %v481
    %483 = vdwg.mxu0
    %484 = vmatpush.msra.mxu0 %v115
    %485 = vmatpush.msra.mxu0 %v111
    %486 = vmatpush.msra.mxu0 %v107
    %487 = vmatpush.msra.mxu0 %v103
    %488 = vmatpush.msra.mxu0 %v99
    %489 = vmatpush.msra.mxu0 %v95
    %490 = vmatpush.msra.mxu0 %v91
    %491 = vmatpush.msra.mxu0 %v87
    %492 = vmatpush.msra.mxu0 %v83
    %493 = vmatpush.msra.mxu0 %v79
    %494 = vmatpush.msra.mxu0 %v75
    %495 = vmatpush.msra.mxu0 %v71
    %496 = vmatpush.msra.mxu0 %v67
    %497 = vmatpush.msra.mxu0 %v63
    %498 = vmatpush.msra.mxu0 %v59
    %499 = vmatpush.msra.mxu0 %v55
    %500 = vmatmul.f32.gmra.mxu0 %v438
    %v501 = vpop.f32.mrf.mxu0
    %v502 = vadd.f32 0.0, %v501
    %503 = vdwg.mxu0
    %504 = vmatpush.msra.mxu0 %v116
    %505 = vmatpush.msra.mxu0 %v112
    %506 = vmatpush.msra.mxu0 %v108
    %507 = vmatpush.msra.mxu0 %v104
    %508 = vmatpush.msra.mxu0 %v100
    %509 = vmatpush.msra.mxu0 %v96
    %510 = vmatpush.msra.mxu0 %v92
    %511 = vmatpush.msra.mxu0 %v88
    %512 = vmatpush.msra.mxu0 %v84
    %513 = vmatpush.msra.mxu0 %v80
    %514 = vmatpush.msra.mxu0 %v76
    %515 = vmatpush.msra.mxu0 %v72
    %516 = vmatpush.msra.mxu0 %v68
    %517 = vmatpush.msra.mxu0 %v64
    %518 = vmatpush.msra.mxu0 %v60
    %519 = vmatpush.msra.mxu0 %v56
    %520 = vmatmul.f32.gmra.mxu0 %v438
    %v521 = vpop.f32.mrf.mxu0
    %v522 = vadd.f32 0.0, %v521
    %523 = vdwg.mxu0
    %v524 = vadd.f32 %v440, %v462
    %v525 = vadd.f32 %v441, %v482
    %v526 = vadd.f32 %v442, %v502
    %v527 = vadd.f32 %v443, %v522
    %v528 = vmul.f32 %v524, 0.5
    %v529 = vtanh.pop %v528
    %v530 = vmul.f32 %v529, 0.5
    %v531 = vadd.f32 %v530, 0.5
    %v532 = vmul.f32 %v525, 0.5
    %v533 = vtanh.pop %v532
    %v534 = vmul.f32 %v533, 0.5
    %v535 = vadd.f32 %v534, 0.5
    %v536 = vtanh.pop %v526
    %v537 = vmul.f32 %v527, 0.5
    %v538 = vtanh.pop %v537
    %v539 = vmul.f32 %v538, 0.5
    %v540 = vadd.f32 %v539, 0.5
    %v541 = vmul.f32 %v535, %v436
    %v542 = vmul.f32 %v531, %v536
    %v543 = vadd.f32 %v541, %v542
    %v544 = vtanh.pop %v543
    %v545 = vmul.f32 %v540, %v544
    %s546 = scalar_lea.vmem [#allocation4], 128
    %v547 = vld [vmem:[%s546] sm:$0xff]
    %v548 = vld [vmem:[%s546 + $0x8] sm:$0xff]
    %v549 = vld [vmem:[%s546 + $0x10] sm:$0xff]
    %v550 = vld [vmem:[%s546 + $0x18] sm:$0xff]
    %551 = vmatpush.msra.mxu0 %v113
    %552 = vmatpush.msra.mxu0 %v109
    %553 = vmatpush.msra.mxu0 %v105
    %554 = vmatpush.msra.mxu0 %v101
    %555 = vmatpush.msra.mxu0 %v97
    %556 = vmatpush.msra.mxu0 %v93
    %557 = vmatpush.msra.mxu0 %v89
    %558 = vmatpush.msra.mxu0 %v85
    %559 = vmatpush.msra.mxu0 %v81
    %560 = vmatpush.msra.mxu0 %v77
    %561 = vmatpush.msra.mxu0 %v73
    %562 = vmatpush.msra.mxu0 %v69
    %563 = vmatpush.msra.mxu0 %v65
    %564 = vmatpush.msra.mxu0 %v61
    %565 = vmatpush.msra.mxu0 %v57
    %566 = vmatpush.msra.mxu0 %v53
    %567 = vmatmul.f32.gmra.mxu0 %v545
    %v568 = vpop.f32.mrf.mxu0
    %v569 = vadd.f32 0.0, %v568
    %570 = vdwg.mxu0
    %571 = vmatpush.msra.mxu0 %v114
    %572 = vmatpush.msra.mxu0 %v110
    %573 = vmatpush.msra.mxu0 %v106
    %574 = vmatpush.msra.mxu0 %v102
    %575 = vmatpush.msra.mxu0 %v98
    %576 = vmatpush.msra.mxu0 %v94
    %577 = vmatpush.msra.mxu0 %v90
    %578 = vmatpush.msra.mxu0 %v86
    %579 = vmatpush.msra.mxu0 %v82
    %580 = vmatpush.msra.mxu0 %v78
    %581 = vmatpush.msra.mxu0 %v74
    %582 = vmatpush.msra.mxu0 %v70
    %583 = vmatpush.msra.mxu0 %v66
    %584 = vmatpush.msra.mxu0 %v62
    %585 = vmatpush.msra.mxu0 %v58
    %586 = vmatpush.msra.mxu0 %v54
    %587 = vmatmul.f32.gmra.mxu0 %v545
    %v588 = vpop.f32.mrf.mxu0
    %v589 = vadd.f32 0.0, %v588
    %590 = vdwg.mxu0
    %591 = vmatpush.msra.mxu0 %v115
    %592 = vmatpush.msra.mxu0 %v111
    %593 = vmatpush.msra.mxu0 %v107
    %594 = vmatpush.msra.mxu0 %v103
    %595 = vmatpush.msra.mxu0 %v99
    %596 = vmatpush.msra.mxu0 %v95
    %597 = vmatpush.msra.mxu0 %v91
    %598 = vmatpush.msra.mxu0 %v87
    %599 = vmatpush.msra.mxu0 %v83
    %600 = vmatpush.msra.mxu0 %v79
    %601 = vmatpush.msra.mxu0 %v75
    %602 = vmatpush.msra.mxu0 %v71
    %603 = vmatpush.msra.mxu0 %v67
    %604 = vmatpush.msra.mxu0 %v63
    %605 = vmatpush.msra.mxu0 %v59
    %606 = vmatpush.msra.mxu0 %v55
    %607 = vmatmul.f32.gmra.mxu0 %v545
    %v608 = vpop.f32.mrf.mxu0
    %v609 = vadd.f32 0.0, %v608
    %610 = vdwg.mxu0
    %611 = vmatpush.msra.mxu0 %v116
    %612 = vmatpush.msra.mxu0 %v112
    %613 = vmatpush.msra.mxu0 %v108
    %614 = vmatpush.msra.mxu0 %v104
    %615 = vmatpush.msra.mxu0 %v100
    %616 = vmatpush.msra.mxu0 %v96
    %617 = vmatpush.msra.mxu0 %v92
    %618 = vmatpush.msra.mxu0 %v88
    %619 = vmatpush.msra.mxu0 %v84
    %620 = vmatpush.msra.mxu0 %v80
    %621 = vmatpush.msra.mxu0 %v76
    %622 = vmatpush.msra.mxu0 %v72
    %623 = vmatpush.msra.mxu0 %v68
    %624 = vmatpush.msra.mxu0 %v64
    %625 = vmatpush.msra.mxu0 %v60
    %626 = vmatpush.msra.mxu0 %v56
    %627 = vmatmul.f32.gmra.mxu0 %v545
    %v628 = vpop.f32.mrf.mxu0
    %v629 = vadd.f32 0.0, %v628
    %630 = vdwg.mxu0
    %v631 = vadd.f32 %v547, %v569
    %v632 = vadd.f32 %v548, %v589
    %v633 = vadd.f32 %v549, %v609
    %v634 = vadd.f32 %v550, %v629
    %v635 = vmul.f32 %v631, 0.5
    %v636 = vtanh.pop %v635
    %v637 = vmul.f32 %v636, 0.5
    %v638 = vadd.f32 %v637, 0.5
    %v639 = vmul.f32 %v632, 0.5
    %v640 = vtanh.pop %v639
    %v641 = vmul.f32 %v640, 0.5
    %v642 = vadd.f32 %v641, 0.5
    %v643 = vtanh.pop %v633
    %v644 = vmul.f32 %v634, 0.5
    %v645 = vtanh.pop %v644
    %v646 = vmul.f32 %v645, 0.5
    %v647 = vadd.f32 %v646, 0.5
    %v648 = vmul.f32 %v642, %v543
    %v649 = vmul.f32 %v638, %v643
    %v650 = vadd.f32 %v648, %v649
    %v651 = vtanh.pop %v650
    %v652 = vmul.f32 %v647, %v651
    %s653 = scalar_lea.vmem [#allocation4], 160
    %v654 = vld [vmem:[%s653] sm:$0xff]
    %v655 = vld [vmem:[%s653 + $0x8] sm:$0xff]
    %v656 = vld [vmem:[%s653 + $0x10] sm:$0xff]
    %v657 = vld [vmem:[%s653 + $0x18] sm:$0xff]
    %658 = vmatpush.msra.mxu0 %v113
    %659 = vmatpush.msra.mxu0 %v109
    %660 = vmatpush.msra.mxu0 %v105
    %661 = vmatpush.msra.mxu0 %v101
    %662 = vmatpush.msra.mxu0 %v97
    %663 = vmatpush.msra.mxu0 %v93
    %664 = vmatpush.msra.mxu0 %v89
    %665 = vmatpush.msra.mxu0 %v85
    %666 = vmatpush.msra.mxu0 %v81
    %667 = vmatpush.msra.mxu0 %v77
    %668 = vmatpush.msra.mxu0 %v73
    %669 = vmatpush.msra.mxu0 %v69
    %670 = vmatpush.msra.mxu0 %v65
    %671 = vmatpush.msra.mxu0 %v61
    %672 = vmatpush.msra.mxu0 %v57
    %673 = vmatpush.msra.mxu0 %v53
    %674 = vmatmul.f32.gmra.mxu0 %v652
    %v675 = vpop.f32.mrf.mxu0
    %v676 = vadd.f32 0.0, %v675
    %677 = vdwg.mxu0
    %678 = vmatpush.msra.mxu0 %v114
    %679 = vmatpush.msra.mxu0 %v110
    %680 = vmatpush.msra.mxu0 %v106
    %681 = vmatpush.msra.mxu0 %v102
    %682 = vmatpush.msra.mxu0 %v98
    %683 = vmatpush.msra.mxu0 %v94
    %684 = vmatpush.msra.mxu0 %v90
    %685 = vmatpush.msra.mxu0 %v86
    %686 = vmatpush.msra.mxu0 %v82
    %687 = vmatpush.msra.mxu0 %v78
    %688 = vmatpush.msra.mxu0 %v74
    %689 = vmatpush.msra.mxu0 %v70
    %690 = vmatpush.msra.mxu0 %v66
    %691 = vmatpush.msra.mxu0 %v62
    %692 = vmatpush.msra.mxu0 %v58
    %693 = vmatpush.msra.mxu0 %v54
    %694 = vmatmul.f32.gmra.mxu0 %v652
    %v695 = vpop.f32.mrf.mxu0
    %v696 = vadd.f32 0.0, %v695
    %697 = vdwg.mxu0
    %698 = vmatpush.msra.mxu0 %v115
    %699 = vmatpush.msra.mxu0 %v111
    %700 = vmatpush.msra.mxu0 %v107
    %701 = vmatpush.msra.mxu0 %v103
    %702 = vmatpush.msra.mxu0 %v99
    %703 = vmatpush.msra.mxu0 %v95
    %704 = vmatpush.msra.mxu0 %v91
    %705 = vmatpush.msra.mxu0 %v87
    %706 = vmatpush.msra.mxu0 %v83
    %707 = vmatpush.msra.mxu0 %v79
    %708 = vmatpush.msra.mxu0 %v75
    %709 = vmatpush.msra.mxu0 %v71
    %710 = vmatpush.msra.mxu0 %v67
    %711 = vmatpush.msra.mxu0 %v63
    %712 = vmatpush.msra.mxu0 %v59
    %713 = vmatpush.msra.mxu0 %v55
    %714 = vmatmul.f32.gmra.mxu0 %v652
    %v715 = vpop.f32.mrf.mxu0
    %v716 = vadd.f32 0.0, %v715
    %717 = vdwg.mxu0
    %718 = vmatpush.msra.mxu0 %v116
    %719 = vmatpush.msra.mxu0 %v112
    %720 = vmatpush.msra.mxu0 %v108
    %721 = vmatpush.msra.mxu0 %v104
    %722 = vmatpush.msra.mxu0 %v100
    %723 = vmatpush.msra.mxu0 %v96
    %724 = vmatpush.msra.mxu0 %v92
    %725 = vmatpush.msra.mxu0 %v88
    %726 = vmatpush.msra.mxu0 %v84
    %727 = vmatpush.msra.mxu0 %v80
    %728 = vmatpush.msra.mxu0 %v76
    %729 = vmatpush.msra.mxu0 %v72
    %730 = vmatpush.msra.mxu0 %v68
    %731 = vmatpush.msra.mxu0 %v64
    %732 = vmatpush.msra.mxu0 %v60
    %733 = vmatpush.msra.mxu0 %v56
    %734 = vmatmul.f32.gmra.mxu0 %v652
    %v735 = vpop.f32.mrf.mxu0
    %v736 = vadd.f32 0.0, %v735
    %737 = vdwg.mxu0
    %v738 = vadd.f32 %v654, %v676
    %v739 = vadd.f32 %v655, %v696
    %v740 = vadd.f32 %v656, %v716
    %v741 = vadd.f32 %v657, %v736
    %v742 = vmul.f32 %v738, 0.5
    %v743 = vtanh.pop %v742
    %v744 = vmul.f32 %v743, 0.5
    %v745 = vadd.f32 %v744, 0.5
    %v746 = vmul.f32 %v739, 0.5
    %v747 = vtanh.pop %v746
    %v748 = vmul.f32 %v747, 0.5
    %v749 = vadd.f32 %v748, 0.5
    %v750 = vtanh.pop %v740
    %v751 = vmul.f32 %v741, 0.5
    %v752 = vtanh.pop %v751
    %v753 = vmul.f32 %v752, 0.5
    %v754 = vadd.f32 %v753, 0.5
    %v755 = vmul.f32 %v749, %v650
    %v756 = vmul.f32 %v745, %v750
    %v757 = vadd.f32 %v755, %v756
    %v758 = vtanh.pop %v757
    %v759 = vmul.f32 %v754, %v758
    %s760 = scalar_lea.vmem [#allocation4], 192
    %v761 = vld [vmem:[%s760] sm:$0xff]
    %v762 = vld [vmem:[%s760 + $0x8] sm:$0xff]
    %v763 = vld [vmem:[%s760 + $0x10] sm:$0xff]
    %v764 = vld [vmem:[%s760 + $0x18] sm:$0xff]
    %765 = vmatpush.msra.mxu0 %v113
    %766 = vmatpush.msra.mxu0 %v109
    %767 = vmatpush.msra.mxu0 %v105
    %768 = vmatpush.msra.mxu0 %v101
    %769 = vmatpush.msra.mxu0 %v97
    %770 = vmatpush.msra.mxu0 %v93
    %771 = vmatpush.msra.mxu0 %v89
    %772 = vmatpush.msra.mxu0 %v85
    %773 = vmatpush.msra.mxu0 %v81
    %774 = vmatpush.msra.mxu0 %v77
    %775 = vmatpush.msra.mxu0 %v73
    %776 = vmatpush.msra.mxu0 %v69
    %777 = vmatpush.msra.mxu0 %v65
    %778 = vmatpush.msra.mxu0 %v61
    %779 = vmatpush.msra.mxu0 %v57
    %780 = vmatpush.msra.mxu0 %v53
    %781 = vmatmul.f32.gmra.mxu0 %v759
    %v782 = vpop.f32.mrf.mxu0
    %v783 = vadd.f32 0.0, %v782
    %784 = vdwg.mxu0
    %785 = vmatpush.msra.mxu0 %v114
    %786 = vmatpush.msra.mxu0 %v110
    %787 = vmatpush.msra.mxu0 %v106
    %788 = vmatpush.msra.mxu0 %v102
    %789 = vmatpush.msra.mxu0 %v98
    %790 = vmatpush.msra.mxu0 %v94
    %791 = vmatpush.msra.mxu0 %v90
    %792 = vmatpush.msra.mxu0 %v86
    %793 = vmatpush.msra.mxu0 %v82
    %794 = vmatpush.msra.mxu0 %v78
    %795 = vmatpush.msra.mxu0 %v74
    %796 = vmatpush.msra.mxu0 %v70
    %797 = vmatpush.msra.mxu0 %v66
    %798 = vmatpush.msra.mxu0 %v62
    %799 = vmatpush.msra.mxu0 %v58
    %800 = vmatpush.msra.mxu0 %v54
    %801 = vmatmul.f32.gmra.mxu0 %v759
    %v802 = vpop.f32.mrf.mxu0
    %v803 = vadd.f32 0.0, %v802
    %804 = vdwg.mxu0
    %805 = vmatpush.msra.mxu0 %v115
    %806 = vmatpush.msra.mxu0 %v111
    %807 = vmatpush.msra.mxu0 %v107
    %808 = vmatpush.msra.mxu0 %v103
    %809 = vmatpush.msra.mxu0 %v99
    %810 = vmatpush.msra.mxu0 %v95
    %811 = vmatpush.msra.mxu0 %v91
    %812 = vmatpush.msra.mxu0 %v87
    %813 = vmatpush.msra.mxu0 %v83
    %814 = vmatpush.msra.mxu0 %v79
    %815 = vmatpush.msra.mxu0 %v75
    %816 = vmatpush.msra.mxu0 %v71
    %817 = vmatpush.msra.mxu0 %v67
    %818 = vmatpush.msra.mxu0 %v63
    %819 = vmatpush.msra.mxu0 %v59
    %820 = vmatpush.msra.mxu0 %v55
    %821 = vmatmul.f32.gmra.mxu0 %v759
    %v822 = vpop.f32.mrf.mxu0
    %v823 = vadd.f32 0.0, %v822
    %824 = vdwg.mxu0
    %825 = vmatpush.msra.mxu0 %v116
    %826 = vmatpush.msra.mxu0 %v112
    %827 = vmatpush.msra.mxu0 %v108
    %828 = vmatpush.msra.mxu0 %v104
    %829 = vmatpush.msra.mxu0 %v100
    %830 = vmatpush.msra.mxu0 %v96
    %831 = vmatpush.msra.mxu0 %v92
    %832 = vmatpush.msra.mxu0 %v88
    %833 = vmatpush.msra.mxu0 %v84
    %834 = vmatpush.msra.mxu0 %v80
    %835 = vmatpush.msra.mxu0 %v76
    %836 = vmatpush.msra.mxu0 %v72
    %837 = vmatpush.msra.mxu0 %v68
    %838 = vmatpush.msra.mxu0 %v64
    %839 = vmatpush.msra.mxu0 %v60
    %840 = vmatpush.msra.mxu0 %v56
    %841 = vmatmul.f32.gmra.mxu0 %v759
    %v842 = vpop.f32.mrf.mxu0
    %v843 = vadd.f32 0.0, %v842
    %844 = vdwg.mxu0
    %v845 = vadd.f32 %v761, %v783
    %v846 = vadd.f32 %v762, %v803
    %v847 = vadd.f32 %v763, %v823
    %v848 = vadd.f32 %v764, %v843
    %v849 = vmul.f32 %v845, 0.5
    %v850 = vtanh.pop %v849
    %v851 = vmul.f32 %v850, 0.5
    %v852 = vadd.f32 %v851, 0.5
    %v853 = vmul.f32 %v846, 0.5
    %v854 = vtanh.pop %v853
    %v855 = vmul.f32 %v854, 0.5
    %v856 = vadd.f32 %v855, 0.5
    %v857 = vtanh.pop %v847
    %v858 = vmul.f32 %v848, 0.5
    %v859 = vtanh.pop %v858
    %v860 = vmul.f32 %v859, 0.5
    %v861 = vadd.f32 %v860, 0.5
    %v862 = vmul.f32 %v856, %v757
    %v863 = vmul.f32 %v852, %v857
    %v864 = vadd.f32 %v862, %v863
    %v865 = vtanh.pop %v864
    %v866 = vmul.f32 %v861, %v865
    %s867 = scalar_lea.vmem [#allocation4], 224
    %v868 = vld [vmem:[%s867] sm:$0xff]
    %v869 = vld [vmem:[%s867 + $0x8] sm:$0xff]
    %v870 = vld [vmem:[%s867 + $0x10] sm:$0xff]
    %v871 = vld [vmem:[%s867 + $0x18] sm:$0xff]
    %872 = vmatpush.msra.mxu0 %v113
    %873 = vmatpush.msra.mxu0 %v109
    %874 = vmatpush.msra.mxu0 %v105
    %875 = vmatpush.msra.mxu0 %v101
    %876 = vmatpush.msra.mxu0 %v97
    %877 = vmatpush.msra.mxu0 %v93
    %878 = vmatpush.msra.mxu0 %v89
    %879 = vmatpush.msra.mxu0 %v85
    %880 = vmatpush.msra.mxu0 %v81
    %881 = vmatpush.msra.mxu0 %v77
    %882 = vmatpush.msra.mxu0 %v73
    %883 = vmatpush.msra.mxu0 %v69
    %884 = vmatpush.msra.mxu0 %v65
    %885 = vmatpush.msra.mxu0 %v61
    %886 = vmatpush.msra.mxu0 %v57
    %887 = vmatpush.msra.mxu0 %v53
    %888 = vmatmul.f32.gmra.mxu0 %v866
    %v889 = vpop.f32.mrf.mxu0
    %v890 = vadd.f32 0.0, %v889
    %891 = vdwg.mxu0
    %892 = vmatpush.msra.mxu0 %v114
    %893 = vmatpush.msra.mxu0 %v110
    %894 = vmatpush.msra.mxu0 %v106
    %895 = vmatpush.msra.mxu0 %v102
    %896 = vmatpush.msra.mxu0 %v98
    %897 = vmatpush.msra.mxu0 %v94
    %898 = vmatpush.msra.mxu0 %v90
    %899 = vmatpush.msra.mxu0 %v86
    %900 = vmatpush.msra.mxu0 %v82
    %901 = vmatpush.msra.mxu0 %v78
    %902 = vmatpush.msra.mxu0 %v74
    %903 = vmatpush.msra.mxu0 %v70
    %904 = vmatpush.msra.mxu0 %v66
    %905 = vmatpush.msra.mxu0 %v62
    %906 = vmatpush.msra.mxu0 %v58
    %907 = vmatpush.msra.mxu0 %v54
    %908 = vmatmul.f32.gmra.mxu0 %v866
    %v909 = vpop.f32.mrf.mxu0
    %v910 = vadd.f32 0.0, %v909
    %911 = vdwg.mxu0
    %912 = vmatpush.msra.mxu0 %v115
    %913 = vmatpush.msra.mxu0 %v111
    %914 = vmatpush.msra.mxu0 %v107
    %915 = vmatpush.msra.mxu0 %v103
    %916 = vmatpush.msra.mxu0 %v99
    %917 = vmatpush.msra.mxu0 %v95
    %918 = vmatpush.msra.mxu0 %v91
    %919 = vmatpush.msra.mxu0 %v87
    %920 = vmatpush.msra.mxu0 %v83
    %921 = vmatpush.msra.mxu0 %v79
    %922 = vmatpush.msra.mxu0 %v75
    %923 = vmatpush.msra.mxu0 %v71
    %924 = vmatpush.msra.mxu0 %v67
    %925 = vmatpush.msra.mxu0 %v63
    %926 = vmatpush.msra.mxu0 %v59
    %927 = vmatpush.msra.mxu0 %v55
    %928 = vmatmul.f32.gmra.mxu0 %v866
    %v929 = vpop.f32.mrf.mxu0
    %v930 = vadd.f32 0.0, %v929
    %931 = vdwg.mxu0
    %932 = vmatpush.msra.mxu0 %v116
    %933 = vmatpush.msra.mxu0 %v112
    %934 = vmatpush.msra.mxu0 %v108
    %935 = vmatpush.msra.mxu0 %v104
    %936 = vmatpush.msra.mxu0 %v100
    %937 = vmatpush.msra.mxu0 %v96
    %938 = vmatpush.msra.mxu0 %v92
    %939 = vmatpush.msra.mxu0 %v88
    %940 = vmatpush.msra.mxu0 %v84
    %941 = vmatpush.msra.mxu0 %v80
    %942 = vmatpush.msra.mxu0 %v76
    %943 = vmatpush.msra.mxu0 %v72
    %944 = vmatpush.msra.mxu0 %v68
    %945 = vmatpush.msra.mxu0 %v64
    %946 = vmatpush.msra.mxu0 %v60
    %947 = vmatpush.msra.mxu0 %v56
    %948 = vmatmul.f32.gmra.mxu0 %v866
    %v949 = vpop.f32.mrf.mxu0
    %v950 = vadd.f32 0.0, %v949
    %951 = vdwg.mxu0
    %v952 = vadd.f32 %v868, %v890
    %v953 = vadd.f32 %v869, %v910
    %v954 = vadd.f32 %v870, %v930
    %v955 = vadd.f32 %v871, %v950
    %v956 = vmul.f32 %v952, 0.5
    %v957 = vtanh.pop %v956
    %v958 = vmul.f32 %v957, 0.5
    %v959 = vadd.f32 %v958, 0.5
    %v960 = vmul.f32 %v953, 0.5
    %v961 = vtanh.pop %v960
    %v962 = vmul.f32 %v961, 0.5
    %v963 = vadd.f32 %v962, 0.5
    %v964 = vtanh.pop %v954
    %v965 = vmul.f32 %v955, 0.5
    %v966 = vtanh.pop %v965
    %v967 = vmul.f32 %v966, 0.5
    %v968 = vadd.f32 %v967, 0.5
    %v969 = vmul.f32 %v963, %v864
    %v970 = vmul.f32 %v959, %v964
    %v971 = vadd.f32 %v969, %v970
    %v972 = vtanh.pop %v971
    %v973 = vmul.f32 %v968, %v972
    %974 = vst [vmem:[#allocation2] sm:$0xff] %v973
    %975 = vst [vmem:[#allocation3] sm:$0xff] %v971
    // Predicated region
    $region22: #{tpu_custom_call.1} parent=1 // pred_check
      %p976 = pneg %p47
    $region23: #{tpu_custom_call.1} parent=1 // pred_check_branch
      %978 = sbr.rel (%p976) target = $region25
    $region24: #{tpu_custom_call.1} parent=1 // pred_region
      %v979 = vld [vmem:[#allocation2] sm:$0xff]
      %980 = vst [vmem:[#allocation9] sm:$0xff] %v979
      %v981 = vld [vmem:[#allocation3] sm:$0xff]
      %982 = vst [vmem:[#allocation10] sm:$0xff] %v981
    $region25: #{tpu_custom_call.1} parent=1 // pred_fallthru
      _
    // Predicated region
    $region26: #{tpu_custom_call.1} parent=1 // pred_check
      _
    $region27: #{tpu_custom_call.1} parent=1 // pred_check_branch
      %984 = sbr.rel (0) target = $region29
    $region28: #{tpu_custom_call.1} parent=1 // pred_region
      %986 = vsyncadd [#allocation6], 0
      %s988 = sshll.u32 [#allocation9], 4
      %s989 = int_to_ptr.vmem [resolvable:$true] %s988
      %s990 = sshll.u32 %s2, 4
      %s991 = int_to_ptr.hbm [resolvable:$true] %s990
      %993 = dma.vmem_to_hbm [thread:$0]  %s989, 128, %s991, [#allocation6]
    $region29: #{tpu_custom_call.1} parent=1 // pred_fallthru
      _
    // Predicated region
    $region30: #{tpu_custom_call.1} parent=1 // pred_check
      _
    $region31: #{tpu_custom_call.1} parent=1 // pred_check_branch
      %995 = sbr.rel (0) target = $region33
    $region32: #{tpu_custom_call.1} parent=1 // pred_region
      %997 = vsyncadd [#allocation11], 0
      %s999 = sshll.u32 [#allocation10], 4
      %s1000 = int_to_ptr.vmem [resolvable:$true] %s999
      %s1001 = sshll.u32 %s3, 4
      %s1002 = int_to_ptr.hbm [resolvable:$true] %s1001
      %1004 = dma.vmem_to_hbm [thread:$0]  %s1000, 128, %s1002, [#allocation11]
    $region33: #{tpu_custom_call.1} parent=1 // pred_fallthru
      _
    // Predicated region
    $region34: #{tpu_custom_call.1} parent=1 // pred_check
      _
    $region35: #{tpu_custom_call.1} parent=1 // pred_check_branch
      %1006 = sbr.rel (0) target = $region37
    $region36: #{tpu_custom_call.1} parent=1 // pred_region
      %1008 = dma.done [#allocation6], 128
    $region37: #{tpu_custom_call.1} parent=1 // pred_fallthru
      _
    // Predicated region
    $region38: #{tpu_custom_call.1} parent=1 // pred_check
      _
    $region39: #{tpu_custom_call.1} parent=1 // pred_check_branch
      %1010 = sbr.rel (0) target = $region41
    $region40: #{tpu_custom_call.1} parent=1 // pred_region
      %1012 = dma.done [#allocation11], 128
    $region41: #{tpu_custom_call.1} parent=1 // pred_fallthru
      _
    %1013 = vsyncpa [#allocation5], 1
    %1014 = vsyncpa [#allocation8], 1
    %1015 = vsyncpa [#allocation6], 1
    %1016 = vsyncpa [#allocation11], 1

</llo_original>
